<compile_context>
chip_gen: v7x
topology: tpu7x:2x2x1
jax: 0.10.0
libtpu: 0.0.40
codegen_flags: <defaults>
</compile_context>

<pallas_src>
import functools
import math

import jax
import jax.numpy as jnp
from jax.experimental import pallas as pl
from jax.experimental.pallas import tpu as pltpu

BN_EPS = 1e-5
HEAD_PAD = 128  # lane-dense width for the fused (mu | log_sigma) head


# ---------------------------------------------------------------------------
# In-kernel helpers (traced inside the Pallas kernel body; all f32)
# ---------------------------------------------------------------------------
def _batchnorm1d_train(x):
    """BatchNorm1d(affine=False), training mode, single-pass batch stats.

    Biased variance via E[x^2] - mean^2 (one read of x instead of two).
    Activations here are O(1), so f32 cancellation is not a concern; a
    max(var, 0) guard covers tiny negative round-off.
    """
    inv_n = 1.0 / x.shape[0]
    mean = jnp.sum(x, axis=0, keepdims=True) * inv_n
    ex2 = jnp.sum(x * x, axis=0, keepdims=True) * inv_n
    var = jnp.maximum(ex2 - mean * mean, 0.0)
    return (x - mean) * jax.lax.rsqrt(var + BN_EPS)


def _softmax_rows(x):
    """Numerically stable softmax with an EXACT divide (matches F.softmax)."""
    m = jnp.max(x, axis=-1, keepdims=True)
    e = jnp.exp(x - m)
    return e / jnp.sum(e, axis=-1, keepdims=True)


# ---------------------------------------------------------------------------
# Pallas kernel: whole forward pass (everything resident in VMEM)
# ---------------------------------------------------------------------------
def decoder_kernel(n_layers, *refs):
    # inputs: x, eps, n_layers*(w, b), w_head, b_head, beta
    n_in = 2 + 2 * n_layers + 3
    in_refs = refs[:n_in]
    small_ref, wdist_ref = refs[n_in:]

    it = iter(in_refs)
    x_ref = next(it)
    eps_ref = next(it)

    # --- InferenceNetwork MLP: Linear -> tanh (bf16 MXU operands, f32 accum) --
    h = x_ref[...]                                    # bf16 activations
    for _ in range(n_layers):
        w_ref = next(it)
        b_ref = next(it)
        y = jnp.dot(h, w_ref[...], preferred_element_type=jnp.float32) + b_ref[...]
        h = jnp.tanh(y).astype(jnp.bfloat16)          # tanh in f32, store bf16
    # dropout_enc: identity (see TODO at top)

    w_head_ref = next(it)   # (h_last, HEAD_PAD) = [w_mu | w_sigma | 0-pad]
    b_head_ref = next(it)   # (1, HEAD_PAD)
    beta_ref = next(it)     # (K, V) bf16

    K = eps_ref.shape[1]

    # --- fused, lane-dense mu/sigma head: one (h_last, 128) matmul + BN ------
    head = (jnp.dot(h, w_head_ref[...], preferred_element_type=jnp.float32)
            + b_head_ref[...])
    head_bn = _batchnorm1d_train(head)   # zero-padded columns stay exactly 0

    mu = head_bn[:, :K]
    log_sigma = head_bn[:, K:2 * K]

    # --- reparameterize + theta ----------------------------------------------
    s = jnp.exp(0.5 * log_sigma)                      # std
    sigma = s * s                                     # exp(log_sigma), no 2nd exp
    z = mu + eps_ref[...] * s
    theta = _softmax_rows(z)                          # topic_doc
    # drop_theta: identity (see TODO at top)

    # --- prodLDA word distribution --------------------------------------------
    logits = _batchnorm1d_train(
        jnp.dot(theta.astype(jnp.bfloat16), beta_ref[...],
                preferred_element_type=jnp.float32))
    wdist_ref[...] = _softmax_rows(logits)

    # One lane-dense (B, 4K) = (B, 128) store for the four small results.
    small_ref[...] = jnp.concatenate([mu, log_sigma, sigma, theta], axis=1)


# ---------------------------------------------------------------------------
# Parameter init (deterministic, in-script; master copies kept in f32)
# ---------------------------------------------------------------------------
def _xavier(key, fan_in, fan_out):
    limit = math.sqrt(6.0 / (fan_in + fan_out))
    return jax.random.uniform(key, (fan_in, fan_out), jnp.float32, -limit, limit)


def init_params(key, input_size, n_components, hidden_sizes):
    dims = [input_size] + list(hidden_sizes)
    n_layers = len(dims) - 1  # input_layer + hidden layers
    keys = jax.random.split(key, n_layers + 3)

    layers = []
    for i in range(n_layers):
        w = _xavier(keys[i], dims[i], dims[i + 1])
        b = jnp.zeros((1, dims[i + 1]), jnp.float32)
        layers.append((w, b))

    h_last = hidden_sizes[-1]
    w_mu = _xavier(keys[n_layers], h_last, n_components)
    b_mu = jnp.zeros((1, n_components), jnp.float32)
    w_sig = _xavier(keys[n_layers + 1], h_last, n_components)
    b_sig = jnp.zeros((1, n_components), jnp.float32)
    beta = _xavier(keys[n_layers + 2], n_components, input_size)  # (K, V)

    prior_mean = jnp.zeros((n_components,), jnp.float32)
    prior_variance = jnp.full((n_components,), 1.0 - 1.0 / n_components, jnp.float32)

    return {
        "layers": layers,
        "w_mu": w_mu,
        "b_mu": b_mu,
        "w_sig": w_sig,
        "b_sig": b_sig,
        "beta": beta,
        "prior_mean": prior_mean,
        "prior_variance": prior_variance,
    }


# ---------------------------------------------------------------------------
# One-time weight preparation (hoisted out of the per-call path)
# ---------------------------------------------------------------------------
def prepare_params(params):
    """Build bf16 matmul weights and the padded fused head ONCE."""
    n_components = params["beta"].shape[0]
    h_last = params["w_mu"].shape[0]
    pad = HEAD_PAD - 2 * n_components
    assert pad >= 0, "HEAD_PAD must be >= 2 * n_components"

    w_head = jnp.concatenate(
        [params["w_mu"], params["w_sig"],
         jnp.zeros((h_last, pad), jnp.float32)], axis=1)
    b_head = jnp.concatenate(
        [params["b_mu"], params["b_sig"],
         jnp.zeros((1, pad), jnp.float32)], axis=1)

    return {
        "layers": [(w.astype(jnp.bfloat16), b) for (w, b) in params["layers"]],
        "w_head": w_head.astype(jnp.bfloat16),
        "b_head": b_head,                          # f32, added post-MXU
        "beta_bf16": params["beta"].astype(jnp.bfloat16),
        "beta": params["beta"],                    # f32 master for topic_word output
        "prior_mean": params["prior_mean"],
        "prior_variance": params["prior_variance"],
    }


# ---------------------------------------------------------------------------
# Forward wrapper (jitted: wrapper-side casts/slices fuse around the kernel)
# ---------------------------------------------------------------------------
@jax.jit
def decoder_forward(prepared, x, eps):
    B, V = x.shape
    K = prepared["beta"].shape[0]
    layers = prepared["layers"]
    n_layers = len(layers)

    flat_inputs = [x.astype(jnp.bfloat16), eps.astype(jnp.float32)]
    for w, b in layers:
        flat_inputs += [w, b]
    flat_inputs += [prepared["w_head"], prepared["b_head"], prepared["beta_bf16"]]

    vmem_spec = pl.BlockSpec(memory_space=pltpu.MemorySpace.VMEM)
    out_shapes = (
        jax.ShapeDtypeStruct((B, 4 * K), jnp.float32),  # [mu|log_sigma|sigma|theta]
        jax.ShapeDtypeStruct((B, V), jnp.float32),      # word_dist
    )

    packed, word_dist = pl.pallas_call(
        functools.partial(decoder_kernel, n_layers),
        out_shape=out_shapes,
        in_specs=[vmem_spec] * len(flat_inputs),
        out_specs=(vmem_spec, vmem_spec),
    )(*flat_inputs)

    mu = packed[:, 0 * K:1 * K]
    log_sigma = packed[:, 1 * K:2 * K]
    sigma = packed[:, 2 * K:3 * K]
    theta = packed[:, 3 * K:4 * K]

    # Match the PyTorch return tuple exactly.
    return (
        prepared["prior_mean"],
        prepared["prior_variance"],
        mu,
        sigma,
        log_sigma,
        word_dist,
        prepared["beta"],  # topic_word
        theta,             # topic_doc
    )


# ---------------------------------------------------------------------------
# Main
# ---------------------------------------------------------------------------
if __name__ == "__main__":
    B = 128                  # >=128 MXU rows per dot
    INPUT_SIZE = 256         # vocab size, lane-friendly multiple of 128
    N_COMPONENTS = 32        # 4*K = 128 -> packed small-output store is lane-dense
    HIDDEN_SIZES = (256, 128)

    root = jax.random.PRNGKey(0)
    k_param, k_x, k_eps = jax.random.split(root, 3)

    params = init_params(k_param, INPUT_SIZE, N_COMPONENTS, HIDDEN_SIZES)
    prepared = prepare_params(params)   # one-time bf16 / padded-head prep

    # Bag-of-words-like non-negative input counts.
    x = jax.random.uniform(k_x, (B, INPUT_SIZE), jnp.float32, 0.0, 5.0)
    # Reparameterization noise (torch.randn_like equivalent, supplied deterministically).
    eps = jax.random.normal(k_eps, (B, N_COMPONENTS), jnp.float32)

    outs = decoder_forward(prepared, x, eps)
    outs = jax.block_until_ready(outs)

    (prior_mean, prior_variance, post_mu, post_sigma, post_log_sigma,
     word_dist, topic_word, topic_doc) = outs

    # Light sanity checks (no extra prints on success).
    assert post_mu.shape == (B, N_COMPONENTS)
    assert post_sigma.shape == (B, N_COMPONENTS)
    assert post_log_sigma.shape == (B, N_COMPONENTS)
    assert word_dist.shape == (B, INPUT_SIZE)
    assert topic_doc.shape == (B, N_COMPONENTS)
    assert topic_word.shape == (N_COMPONENTS, INPUT_SIZE)
    assert prior_mean.shape == (N_COMPONENTS,)
    assert prior_variance.shape == (N_COMPONENTS,)
    assert bool(jnp.all(jnp.isfinite(word_dist)))
    assert bool(jnp.all(jnp.isfinite(topic_doc)))
    # Exact softmax divide => rows sum to 1 at f32 precision.
    assert bool(jnp.allclose(jnp.sum(word_dist, axis=1), 1.0, atol=1e-4))
    assert bool(jnp.allclose(jnp.sum(topic_doc, axis=1), 1.0, atol=1e-4))
    # theta and sigma must be positive; sigma = exp(log_sigma).
    assert bool(jnp.all(topic_doc >= 0.0))
    assert bool(jnp.allclose(post_sigma, jnp.exp(post_log_sigma), rtol=1e-5, atol=1e-6))
    # BatchNorm(affine=False, batch stats) => per-feature mean of mu is ~0.
    assert bool(jnp.allclose(jnp.mean(post_mu, axis=0), 0.0, atol=1e-3))
    assert bool(jnp.allclose(jnp.mean(post_log_sigma, axis=0), 0.0, atol=1e-3))

    print("KERNEL_OK")
</pallas_src>

<mosaic_0001>
module attributes {stable_mosaic.version = 11 : i64} {
  func.func @decoder_kernel(%arg0: memref<128x256xbf16, #tpu.memory_space<vmem>>, %arg1: memref<128x32xf32, #tpu.memory_space<vmem>>, %arg2: memref<256x256xbf16, #tpu.memory_space<vmem>>, %arg3: memref<1x256xf32, #tpu.memory_space<vmem>>, %arg4: memref<256x128xbf16, #tpu.memory_space<vmem>>, %arg5: memref<1x128xf32, #tpu.memory_space<vmem>>, %arg6: memref<128x128xbf16, #tpu.memory_space<vmem>>, %arg7: memref<1x128xf32, #tpu.memory_space<vmem>>, %arg8: memref<32x256xbf16, #tpu.memory_space<vmem>>, %arg9: memref<128x128xf32, #tpu.memory_space<vmem>>, %arg10: memref<128x256xf32, #tpu.memory_space<vmem>>) attributes {dimension_semantics = [], scalar_prefetch = 0 : i64, scratch_operands = 0 : i64, tpu.core_type = #tpu.core_type<tc>} {
    %c0 = arith.constant 0 : index
    %c0_0 = arith.constant 0 : index
    %0 = vector.load %arg0[%c0, %c0_0] : memref<128x256xbf16, #tpu.memory_space<vmem>>, vector<128x256xbf16>
    %c0_1 = arith.constant 0 : index
    %c0_2 = arith.constant 0 : index
    %1 = vector.load %arg2[%c0_1, %c0_2] : memref<256x256xbf16, #tpu.memory_space<vmem>>, vector<256x256xbf16>
    %cst = arith.constant dense<0.000000e+00> : vector<128x256xf32>
    %2 = tpu.matmul %0, %1, %cst {dimension_numbers = #tpu.dot_dimension_numbers<[1], [0], [0], [1], [0, 0, 1, 1], [], []>} : vector<128x256xbf16>, vector<256x256xbf16>, vector<128x256xf32> -> vector<128x256xf32>
    %c0_3 = arith.constant 0 : index
    %c0_4 = arith.constant 0 : index
    %3 = vector.load %arg3[%c0_3, %c0_4] : memref<1x256xf32, #tpu.memory_space<vmem>>, vector<1x256xf32>
    %4 = vector.broadcast %3 : vector<1x256xf32> to vector<128x256xf32>
    %5 = arith.addf %2, %4 : vector<128x256xf32>
    %6 = math.tanh %5 : vector<128x256xf32>
    %7 = arith.truncf %6 : vector<128x256xf32> to vector<128x256xbf16>
    %c0_5 = arith.constant 0 : index
    %c0_6 = arith.constant 0 : index
    %8 = vector.load %arg4[%c0_5, %c0_6] : memref<256x128xbf16, #tpu.memory_space<vmem>>, vector<256x128xbf16>
    %cst_7 = arith.constant dense<0.000000e+00> : vector<128x128xf32>
    %9 = tpu.matmul %7, %8, %cst_7 {dimension_numbers = #tpu.dot_dimension_numbers<[1], [0], [0], [1], [0, 0, 1, 1], [], []>} : vector<128x256xbf16>, vector<256x128xbf16>, vector<128x128xf32> -> vector<128x128xf32>
    %c0_8 = arith.constant 0 : index
    %c0_9 = arith.constant 0 : index
    %10 = vector.load %arg5[%c0_8, %c0_9] : memref<1x128xf32, #tpu.memory_space<vmem>>, vector<1x128xf32>
    %11 = vector.broadcast %10 : vector<1x128xf32> to vector<128x128xf32>
    %12 = arith.addf %9, %11 : vector<128x128xf32>
    %13 = math.tanh %12 : vector<128x128xf32>
    %14 = arith.truncf %13 : vector<128x128xf32> to vector<128x128xbf16>
    %c0_10 = arith.constant 0 : index
    %c0_11 = arith.constant 0 : index
    %15 = vector.load %arg6[%c0_10, %c0_11] : memref<128x128xbf16, #tpu.memory_space<vmem>>, vector<128x128xbf16>
    %cst_12 = arith.constant dense<0.000000e+00> : vector<128x128xf32>
    %16 = tpu.matmul %14, %15, %cst_12 {dimension_numbers = #tpu.dot_dimension_numbers<[1], [0], [0], [1], [0, 0, 1, 1], [], []>} : vector<128x128xbf16>, vector<128x128xbf16>, vector<128x128xf32> -> vector<128x128xf32>
    %c0_13 = arith.constant 0 : index
    %c0_14 = arith.constant 0 : index
    %17 = vector.load %arg7[%c0_13, %c0_14] : memref<1x128xf32, #tpu.memory_space<vmem>>, vector<1x128xf32>
    %18 = vector.broadcast %17 : vector<1x128xf32> to vector<128x128xf32>
    %19 = arith.addf %16, %18 : vector<128x128xf32>
    %cst_15 = arith.constant dense<0.000000e+00> : vector<128xf32>
    %20 = vector.multi_reduction <add>, %19, %cst_15 [0] : vector<128x128xf32> to vector<128xf32>
    %21 = vector.shape_cast %20 : vector<128xf32> to vector<1x128xf32>
    %cst_16 = arith.constant 7.812500e-03 : f32
    %22 = vector.broadcast %cst_16 : f32 to vector<1x128xf32>
    %23 = arith.mulf %21, %22 : vector<1x128xf32>
    %24 = arith.mulf %19, %19 : vector<128x128xf32>
    %cst_17 = arith.constant dense<0.000000e+00> : vector<128xf32>
    %25 = vector.multi_reduction <add>, %24, %cst_17 [0] : vector<128x128xf32> to vector<128xf32>
    %26 = vector.shape_cast %25 : vector<128xf32> to vector<1x128xf32>
    %cst_18 = arith.constant 7.812500e-03 : f32
    %27 = vector.broadcast %cst_18 : f32 to vector<1x128xf32>
    %28 = arith.mulf %26, %27 : vector<1x128xf32>
    %29 = arith.mulf %23, %23 : vector<1x128xf32>
    %30 = arith.subf %28, %29 : vector<1x128xf32>
    %cst_19 = arith.constant 0.000000e+00 : f32
    %31 = vector.broadcast %cst_19 : f32 to vector<1x128xf32>
    %32 = arith.maximumf %30, %31 : vector<1x128xf32>
    %33 = vector.broadcast %23 : vector<1x128xf32> to vector<128x128xf32>
    %34 = arith.subf %19, %33 : vector<128x128xf32>
    %cst_20 = arith.constant 9.99999974E-6 : f32
    %35 = vector.broadcast %cst_20 : f32 to vector<1x128xf32>
    %36 = arith.addf %32, %35 : vector<1x128xf32>
    %37 = math.rsqrt %36 : vector<1x128xf32>
    %38 = vector.broadcast %37 : vector<1x128xf32> to vector<128x128xf32>
    %39 = arith.mulf %34, %38 : vector<128x128xf32>
    %40 = vector.extract_strided_slice %39 {offsets = [0, 0], sizes = [128, 32], strides = [1, 1]} : vector<128x128xf32> to vector<128x32xf32>
    %41 = vector.extract_strided_slice %39 {offsets = [0, 32], sizes = [128, 32], strides = [1, 1]} : vector<128x128xf32> to vector<128x32xf32>
    %cst_21 = arith.constant 5.000000e-01 : f32
    %42 = vector.broadcast %cst_21 : f32 to vector<128x32xf32>
    %43 = arith.mulf %42, %41 : vector<128x32xf32>
    %44 = math.exp %43 : vector<128x32xf32>
    %45 = arith.mulf %44, %44 : vector<128x32xf32>
    %c0_22 = arith.constant 0 : index
    %c0_23 = arith.constant 0 : index
    %46 = vector.load %arg1[%c0_22, %c0_23] : memref<128x32xf32, #tpu.memory_space<vmem>>, vector<128x32xf32>
    %47 = arith.mulf %46, %44 : vector<128x32xf32>
    %48 = arith.addf %40, %47 : vector<128x32xf32>
    %cst_24 = arith.constant dense<0xFF800000> : vector<128xf32>
    %49 = vector.multi_reduction <maximumf>, %48, %cst_24 [1] : vector<128x32xf32> to vector<128xf32>
    %50 = vector.shape_cast %49 : vector<128xf32> to vector<128x1xf32>
    %51 = vector.broadcast %50 : vector<128x1xf32> to vector<128x32xf32>
    %52 = arith.subf %48, %51 : vector<128x32xf32>
    %53 = math.exp %52 : vector<128x32xf32>
    %cst_25 = arith.constant dense<0.000000e+00> : vector<128xf32>
    %54 = vector.multi_reduction <add>, %53, %cst_25 [1] : vector<128x32xf32> to vector<128xf32>
    %55 = vector.shape_cast %54 : vector<128xf32> to vector<128x1xf32>
    %56 = vector.broadcast %55 : vector<128x1xf32> to vector<128x32xf32>
    %57 = arith.divf %53, %56 : vector<128x32xf32>
    %58 = arith.truncf %57 : vector<128x32xf32> to vector<128x32xbf16>
    %c0_26 = arith.constant 0 : index
    %c0_27 = arith.constant 0 : index
    %59 = vector.load %arg8[%c0_26, %c0_27] : memref<32x256xbf16, #tpu.memory_space<vmem>>, vector<32x256xbf16>
    %cst_28 = arith.constant dense<0.000000e+00> : vector<128x256xf32>
    %60 = tpu.matmul %58, %59, %cst_28 {dimension_numbers = #tpu.dot_dimension_numbers<[1], [0], [0], [1], [0, 0, 1, 1], [], []>} : vector<128x32xbf16>, vector<32x256xbf16>, vector<128x256xf32> -> vector<128x256xf32>
    %cst_29 = arith.constant dense<0.000000e+00> : vector<256xf32>
    %61 = vector.multi_reduction <add>, %60, %cst_29 [0] : vector<128x256xf32> to vector<256xf32>
    %62 = vector.shape_cast %61 : vector<256xf32> to vector<1x256xf32>
    %cst_30 = arith.constant 7.812500e-03 : f32
    %63 = vector.broadcast %cst_30 : f32 to vector<1x256xf32>
    %64 = arith.mulf %62, %63 : vector<1x256xf32>
    %65 = arith.mulf %60, %60 : vector<128x256xf32>
    %cst_31 = arith.constant dense<0.000000e+00> : vector<256xf32>
    %66 = vector.multi_reduction <add>, %65, %cst_31 [0] : vector<128x256xf32> to vector<256xf32>
    %67 = vector.shape_cast %66 : vector<256xf32> to vector<1x256xf32>
    %cst_32 = arith.constant 7.812500e-03 : f32
    %68 = vector.broadcast %cst_32 : f32 to vector<1x256xf32>
    %69 = arith.mulf %67, %68 : vector<1x256xf32>
    %70 = arith.mulf %64, %64 : vector<1x256xf32>
    %71 = arith.subf %69, %70 : vector<1x256xf32>
    %cst_33 = arith.constant 0.000000e+00 : f32
    %72 = vector.broadcast %cst_33 : f32 to vector<1x256xf32>
    %73 = arith.maximumf %71, %72 : vector<1x256xf32>
    %74 = vector.broadcast %64 : vector<1x256xf32> to vector<128x256xf32>
    %75 = arith.subf %60, %74 : vector<128x256xf32>
    %cst_34 = arith.constant 9.99999974E-6 : f32
    %76 = vector.broadcast %cst_34 : f32 to vector<1x256xf32>
    %77 = arith.addf %73, %76 : vector<1x256xf32>
    %78 = math.rsqrt %77 : vector<1x256xf32>
    %79 = vector.broadcast %78 : vector<1x256xf32> to vector<128x256xf32>
    %80 = arith.mulf %75, %79 : vector<128x256xf32>
    %cst_35 = arith.constant dense<0xFF800000> : vector<128xf32>
    %81 = vector.multi_reduction <maximumf>, %80, %cst_35 [1] : vector<128x256xf32> to vector<128xf32>
    %82 = vector.shape_cast %81 : vector<128xf32> to vector<128x1xf32>
    %83 = vector.broadcast %82 : vector<128x1xf32> to vector<128x256xf32>
    %84 = arith.subf %80, %83 : vector<128x256xf32>
    %85 = math.exp %84 : vector<128x256xf32>
    %cst_36 = arith.constant dense<0.000000e+00> : vector<128xf32>
    %86 = vector.multi_reduction <add>, %85, %cst_36 [1] : vector<128x256xf32> to vector<128xf32>
    %87 = vector.shape_cast %86 : vector<128xf32> to vector<128x1xf32>
    %88 = vector.broadcast %87 : vector<128x1xf32> to vector<128x256xf32>
    %89 = arith.divf %85, %88 : vector<128x256xf32>
    %c0_37 = arith.constant 0 : index
    %c0_38 = arith.constant 0 : index
    %90 = vector.load %arg10[%c0_37, %c0_38] : memref<128x256xf32, #tpu.memory_space<vmem>>, vector<128x256xf32>
    tpu.vector_store %arg10[%c0_37, %c0_38], %89 {strides = array<i32>} : memref<128x256xf32, #tpu.memory_space<vmem>>, vector<128x256xf32>,
    %91 = tpu.concatenate %40, %41, %45, %57 in 1 : vector<128x32xf32>, vector<128x32xf32>, vector<128x32xf32>, vector<128x32xf32> -> vector<128x128xf32>
    %c0_39 = arith.constant 0 : index
    %c0_40 = arith.constant 0 : index
    %92 = vector.load %arg9[%c0_39, %c0_40] : memref<128x128xf32, #tpu.memory_space<vmem>>, vector<128x128xf32>
    tpu.vector_store %arg9[%c0_39, %c0_40], %91 {strides = array<i32>} : memref<128x128xf32, #tpu.memory_space<vmem>>, vector<128x128xf32>,
    return
  }
}

</mosaic_0001>

<llo_original>
// kernel: decoder_forward.1
$region0: #{decoder_forward.1}
  #allocation0 [shape = 'u32[]', space=smem, size = 0x4, offset = 0x4, fixed_abs, tag = 'smem constant byte address 0x4 - core index']
  #allocation1 [shape = 'u32[144,128]{1,0:T(1,128)}', space=vmem, size = 0x12000, scoped, tag = 'internal scratch']
  %s0 = inlined_call_operand.vmem [shape: bf16[128,256], index: 0, kind: input, shape index: {}]
  %s1 = inlined_call_operand.vmem [shape: f32[128,32], index: 1, kind: input, shape index: {}]
  %s2 = inlined_call_operand.vmem [shape: bf16[256,256], index: 2, kind: input, shape index: {}]
  %s3 = inlined_call_operand.vmem [shape: f32[1,256], index: 3, kind: input, shape index: {}]
  %s4 = inlined_call_operand.vmem [shape: bf16[256,128], index: 4, kind: input, shape index: {}]
  %s5 = inlined_call_operand.vmem [shape: f32[1,128], index: 5, kind: input, shape index: {}]
  %s6 = inlined_call_operand.vmem [shape: bf16[128,128], index: 6, kind: input, shape index: {}]
  %s7 = inlined_call_operand.vmem [shape: f32[1,128], index: 7, kind: input, shape index: {}]
  %s8 = inlined_call_operand.vmem [shape: bf16[32,256], index: 8, kind: input, shape index: {}]
  %s9 = inlined_call_operand.vmem [shape: f32[128,128], index: 9, kind: output, shape index: {0}]
  %s10 = inlined_call_operand.hbm [shape: f32[128,256], index: 10, kind: output, shape index: {1}]
  %11 = xla_tuple %s9, %s10
  %s12 = sld [smem:[#allocation0]]
  $region54: #{decoder_forward.1} parent=0
    _
  %s14 = ssub.s32 1, %s12
  %s15 = scalar_select 0, %s14, %s12
  $region1: #{decoder_forward.1} parent=0
    #allocation2 [shape = 'u8[131072]{0}', space=vmem, size = 0x20000, scoped, tag = 'output window, operand 1, single buffered']
    #allocation3 [shape = 's32[1]{0}', space=sflag, size = 0x4, scoped, tag = 'scoped memory for decoder_forward.1']
    %16 = vsyncpa [#allocation3], 0
    // Predicated region
    $region2: #{decoder_forward.1} parent=1 // pred_check
      _
    $region3: #{decoder_forward.1} parent=1 // pred_check_branch
      %18 = sbr.rel (0) target = $region5
    $region4: #{decoder_forward.1} parent=1 // pred_region
      _
    $region5: #{decoder_forward.1} parent=1 // pred_fallthru
      _
    // Predicated region
    $region6: #{decoder_forward.1} parent=1 // pred_check
      _
    $region7: #{decoder_forward.1} parent=1 // pred_check_branch
      %20 = sbr.rel (0) target = $region9
    $region8: #{decoder_forward.1} parent=1 // pred_region
      _
    $region9: #{decoder_forward.1} parent=1 // pred_fallthru
      _
    // Predicated region
    $region10: #{decoder_forward.1} parent=1 // pred_check
      _
    $region11: #{decoder_forward.1} parent=1 // pred_check_branch
      %22 = sbr.rel (0) target = $region13
    $region12: #{decoder_forward.1} parent=1 // pred_region
      _
    $region13: #{decoder_forward.1} parent=1 // pred_fallthru
      _
    // Predicated region
    $region14: #{decoder_forward.1} parent=1 // pred_check
      _
    $region15: #{decoder_forward.1} parent=1 // pred_check_branch
      %24 = sbr.rel (0) target = $region17
    $region16: #{decoder_forward.1} parent=1 // pred_region
      _
    $region17: #{decoder_forward.1} parent=1 // pred_fallthru
      _
    // Predicated region
    $region18: #{decoder_forward.1} parent=1 // pred_check
      _
    $region19: #{decoder_forward.1} parent=1 // pred_check_branch
      %26 = sbr.rel (0) target = $region21
    $region20: #{decoder_forward.1} parent=1 // pred_region
      _
    $region21: #{decoder_forward.1} parent=1 // pred_fallthru
      _
    // Predicated region
    $region22: #{decoder_forward.1} parent=1 // pred_check
      _
    $region23: #{decoder_forward.1} parent=1 // pred_check_branch
      %28 = sbr.rel (0) target = $region25
    $region24: #{decoder_forward.1} parent=1 // pred_region
      _
    $region25: #{decoder_forward.1} parent=1 // pred_fallthru
      _
    // Predicated region
    $region26: #{decoder_forward.1} parent=1 // pred_check
      _
    $region27: #{decoder_forward.1} parent=1 // pred_check_branch
      %30 = sbr.rel (0) target = $region29
    $region28: #{decoder_forward.1} parent=1 // pred_region
      _
    $region29: #{decoder_forward.1} parent=1 // pred_fallthru
      _
    // Predicated region
    $region30: #{decoder_forward.1} parent=1 // pred_check
      _
    $region31: #{decoder_forward.1} parent=1 // pred_check_branch
      %32 = sbr.rel (0) target = $region33
    $region32: #{decoder_forward.1} parent=1 // pred_region
      _
    $region33: #{decoder_forward.1} parent=1 // pred_fallthru
      _
    // Predicated region
    $region34: #{decoder_forward.1} parent=1 // pred_check
      _
    $region35: #{decoder_forward.1} parent=1 // pred_check_branch
      %34 = sbr.rel (0) target = $region37
    $region36: #{decoder_forward.1} parent=1 // pred_region
      _
    $region37: #{decoder_forward.1} parent=1 // pred_fallthru
      _
    %v36 = vld [vmem:[%s0] sm:$0xff]
    %v37 = vld [vmem:[%s0 + $0x8] sm:$0xff]
    %v38 = vld [vmem:[%s0 + $0x10] sm:$0xff]
    %v39 = vld [vmem:[%s0 + $0x18] sm:$0xff]
    %v40 = vld [vmem:[%s0 + $0x20] sm:$0xff]
    %v41 = vld [vmem:[%s0 + $0x28] sm:$0xff]
    %v42 = vld [vmem:[%s0 + $0x30] sm:$0xff]
    %v43 = vld [vmem:[%s0 + $0x38] sm:$0xff]
    %v44 = vld [vmem:[%s0 + $0x40] sm:$0xff]
    %v45 = vld [vmem:[%s0 + $0x48] sm:$0xff]
    %v46 = vld [vmem:[%s0 + $0x50] sm:$0xff]
    %v47 = vld [vmem:[%s0 + $0x58] sm:$0xff]
    %v48 = vld [vmem:[%s0 + $0x60] sm:$0xff]
    %v49 = vld [vmem:[%s0 + $0x68] sm:$0xff]
    %v50 = vld [vmem:[%s0 + $0x70] sm:$0xff]
    %v51 = vld [vmem:[%s0 + $0x78] sm:$0xff]
    %v52 = vld [vmem:[%s2] sm:$0xff]
    %v53 = vld [vmem:[%s2 + $0x8] sm:$0xff]
    %v54 = vld [vmem:[%s2 + $0x10] sm:$0xff]
    %v55 = vld [vmem:[%s2 + $0x18] sm:$0xff]
    %v56 = vld [vmem:[%s2 + $0x20] sm:$0xff]
    %v57 = vld [vmem:[%s2 + $0x28] sm:$0xff]
    %v58 = vld [vmem:[%s2 + $0x30] sm:$0xff]
    %v59 = vld [vmem:[%s2 + $0x38] sm:$0xff]
    %v60 = vld [vmem:[%s2 + $0x40] sm:$0xff]
    %v61 = vld [vmem:[%s2 + $0x48] sm:$0xff]
    %v62 = vld [vmem:[%s2 + $0x50] sm:$0xff]
    %v63 = vld [vmem:[%s2 + $0x58] sm:$0xff]
    %v64 = vld [vmem:[%s2 + $0x60] sm:$0xff]
    %v65 = vld [vmem:[%s2 + $0x68] sm:$0xff]
    %v66 = vld [vmem:[%s2 + $0x70] sm:$0xff]
    %v67 = vld [vmem:[%s2 + $0x78] sm:$0xff]
    %v68 = vld [vmem:[%s2 + $0x80] sm:$0xff]
    %v69 = vld [vmem:[%s2 + $0x88] sm:$0xff]
    %v70 = vld [vmem:[%s2 + $0x90] sm:$0xff]
    %v71 = vld [vmem:[%s2 + $0x98] sm:$0xff]
    %v72 = vld [vmem:[%s2 + $0xa0] sm:$0xff]
    %v73 = vld [vmem:[%s2 + $0xa8] sm:$0xff]
    %v74 = vld [vmem:[%s2 + $0xb0] sm:$0xff]
    %v75 = vld [vmem:[%s2 + $0xb8] sm:$0xff]
    %v76 = vld [vmem:[%s2 + $0xc0] sm:$0xff]
    %v77 = vld [vmem:[%s2 + $0xc8] sm:$0xff]
    %v78 = vld [vmem:[%s2 + $0xd0] sm:$0xff]
    %v79 = vld [vmem:[%s2 + $0xd8] sm:$0xff]
    %v80 = vld [vmem:[%s2 + $0xe0] sm:$0xff]
    %v81 = vld [vmem:[%s2 + $0xe8] sm:$0xff]
    %v82 = vld [vmem:[%s2 + $0xf0] sm:$0xff]
    %v83 = vld [vmem:[%s2 + $0xf8] sm:$0xff]
    %v84 = vld [vmem:[%s3] sm:$0x3]
    %v86 = vlaneseq
    %v87 = vshrl.u32 %v86, 7
    %v88 = vsub.s32 0, %v87
    %v89 = vrot.slane %v84, %v88
    %v90 = vlaneseq
    %v91 = vshrl.u32 %v90, 7
    %v92 = vsub.s32 1, %v91
    %v93 = vrot.slane %v84, %v92
    %v112 = vunpack.c.l.b16 %v36
    %v113 = vunpack.c.h.b16 %v36
    %v114 = vunpack.c.l.b16 %v37
    %v115 = vunpack.c.h.b16 %v37
    %v116 = vunpack.c.l.b16 %v38
    %v117 = vunpack.c.h.b16 %v38
    %v118 = vunpack.c.l.b16 %v39
    %v119 = vunpack.c.h.b16 %v39
    %v120 = vunpack.c.l.b16 %v40
    %v121 = vunpack.c.h.b16 %v40
    %v122 = vunpack.c.l.b16 %v41
    %v123 = vunpack.c.h.b16 %v41
    %v124 = vunpack.c.l.b16 %v42
    %v125 = vunpack.c.h.b16 %v42
    %v126 = vunpack.c.l.b16 %v43
    %v127 = vunpack.c.h.b16 %v43
    %v128 = vunpack.c.l.b16 %v44
    %v129 = vunpack.c.h.b16 %v44
    %v130 = vunpack.c.l.b16 %v45
    %v131 = vunpack.c.h.b16 %v45
    %v132 = vunpack.c.l.b16 %v46
    %v133 = vunpack.c.h.b16 %v46
    %v134 = vunpack.c.l.b16 %v47
    %v135 = vunpack.c.h.b16 %v47
    %v136 = vunpack.c.l.b16 %v48
    %v137 = vunpack.c.h.b16 %v48
    %v138 = vunpack.c.l.b16 %v49
    %v139 = vunpack.c.h.b16 %v49
    %v140 = vunpack.c.l.b16 %v50
    %v141 = vunpack.c.h.b16 %v50
    %v142 = vunpack.c.l.b16 %v51
    %v143 = vunpack.c.h.b16 %v51
    %v144 = vpack.c.b16 %v114, %v112
    %v145 = vpack.c.b16 %v115, %v113
    %v146 = vpack.c.b16 %v118, %v116
    %v147 = vpack.c.b16 %v119, %v117
    %v148 = vpack.c.b16 %v122, %v120
    %v149 = vpack.c.b16 %v123, %v121
    %v150 = vpack.c.b16 %v126, %v124
    %v151 = vpack.c.b16 %v127, %v125
    %v152 = vpack.c.b16 %v130, %v128
    %v153 = vpack.c.b16 %v131, %v129
    %v154 = vpack.c.b16 %v134, %v132
    %v155 = vpack.c.b16 %v135, %v133
    %v156 = vpack.c.b16 %v138, %v136
    %v157 = vpack.c.b16 %v139, %v137
    %v158 = vpack.c.b16 %v142, %v140
    %v159 = vpack.c.b16 %v143, %v141
    %v208 = vunpack.c.l.b16 %v52
    %v209 = vunpack.c.h.b16 %v52
    %v210 = vunpack.c.l.b16 %v53
    %v211 = vunpack.c.h.b16 %v53
    %v212 = vunpack.c.l.b16 %v54
    %v213 = vunpack.c.h.b16 %v54
    %v214 = vunpack.c.l.b16 %v55
    %v215 = vunpack.c.h.b16 %v55
    %v216 = vunpack.c.l.b16 %v56
    %v217 = vunpack.c.h.b16 %v56
    %v218 = vunpack.c.l.b16 %v57
    %v219 = vunpack.c.h.b16 %v57
    %v220 = vunpack.c.l.b16 %v58
    %v221 = vunpack.c.h.b16 %v58
    %v222 = vunpack.c.l.b16 %v59
    %v223 = vunpack.c.h.b16 %v59
    %v224 = vunpack.c.l.b16 %v60
    %v225 = vunpack.c.h.b16 %v60
    %v226 = vunpack.c.l.b16 %v61
    %v227 = vunpack.c.h.b16 %v61
    %v228 = vunpack.c.l.b16 %v62
    %v229 = vunpack.c.h.b16 %v62
    %v230 = vunpack.c.l.b16 %v63
    %v231 = vunpack.c.h.b16 %v63
    %v232 = vunpack.c.l.b16 %v64
    %v233 = vunpack.c.h.b16 %v64
    %v234 = vunpack.c.l.b16 %v65
    %v235 = vunpack.c.h.b16 %v65
    %v236 = vunpack.c.l.b16 %v66
    %v237 = vunpack.c.h.b16 %v66
    %v238 = vunpack.c.l.b16 %v67
    %v239 = vunpack.c.h.b16 %v67
    %v240 = vunpack.c.l.b16 %v68
    %v241 = vunpack.c.h.b16 %v68
    %v242 = vunpack.c.l.b16 %v69
    %v243 = vunpack.c.h.b16 %v69
    %v244 = vunpack.c.l.b16 %v70
    %v245 = vunpack.c.h.b16 %v70
    %v246 = vunpack.c.l.b16 %v71
    %v247 = vunpack.c.h.b16 %v71
    %v248 = vunpack.c.l.b16 %v72
    %v249 = vunpack.c.h.b16 %v72
    %v250 = vunpack.c.l.b16 %v73
    %v251 = vunpack.c.h.b16 %v73
    %v252 = vunpack.c.l.b16 %v74
    %v253 = vunpack.c.h.b16 %v74
    %v254 = vunpack.c.l.b16 %v75
    %v255 = vunpack.c.h.b16 %v75
    %v256 = vunpack.c.l.b16 %v76
    %v257 = vunpack.c.h.b16 %v76
    %v258 = vunpack.c.l.b16 %v77
    %v259 = vunpack.c.h.b16 %v77
    %v260 = vunpack.c.l.b16 %v78
    %v261 = vunpack.c.h.b16 %v78
    %v262 = vunpack.c.l.b16 %v79
    %v263 = vunpack.c.h.b16 %v79
    %v264 = vunpack.c.l.b16 %v80
    %v265 = vunpack.c.h.b16 %v80
    %v266 = vunpack.c.l.b16 %v81
    %v267 = vunpack.c.h.b16 %v81
    %v268 = vunpack.c.l.b16 %v82
    %v269 = vunpack.c.h.b16 %v82
    %v270 = vunpack.c.l.b16 %v83
    %v271 = vunpack.c.h.b16 %v83
    %v272 = vpack.c.b16 %v210, %v208
    %v273 = vpack.c.b16 %v211, %v209
    %v274 = vpack.c.b16 %v214, %v212
    %v275 = vpack.c.b16 %v215, %v213
    %v276 = vpack.c.b16 %v218, %v216
    %v277 = vpack.c.b16 %v219, %v217
    %v278 = vpack.c.b16 %v222, %v220
    %v279 = vpack.c.b16 %v223, %v221
    %v280 = vpack.c.b16 %v226, %v224
    %v281 = vpack.c.b16 %v227, %v225
    %v282 = vpack.c.b16 %v230, %v228
    %v283 = vpack.c.b16 %v231, %v229
    %v284 = vpack.c.b16 %v234, %v232
    %v285 = vpack.c.b16 %v235, %v233
    %v286 = vpack.c.b16 %v238, %v236
    %v287 = vpack.c.b16 %v239, %v237
    %v288 = vpack.c.b16 %v242, %v240
    %v289 = vpack.c.b16 %v243, %v241
    %v290 = vpack.c.b16 %v246, %v244
    %v291 = vpack.c.b16 %v247, %v245
    %v292 = vpack.c.b16 %v250, %v248
    %v293 = vpack.c.b16 %v251, %v249
    %v294 = vpack.c.b16 %v254, %v252
    %v295 = vpack.c.b16 %v255, %v253
    %v296 = vpack.c.b16 %v258, %v256
    %v297 = vpack.c.b16 %v259, %v257
    %v298 = vpack.c.b16 %v262, %v260
    %v299 = vpack.c.b16 %v263, %v261
    %v300 = vpack.c.b16 %v266, %v264
    %v301 = vpack.c.b16 %v267, %v265
    %v302 = vpack.c.b16 %v270, %v268
    %v303 = vpack.c.b16 %v271, %v269
    %336 = vmatprep.subr.bf16.mxu0 %v273
    %337 = vmatpush1.bf16.msra.mxu0 %v272
    %338 = vmatprep.subr.bf16.mxu0 %v275
    %339 = vmatpush1.bf16.msra.mxu0 %v274
    %340 = vmatprep.subr.bf16.mxu0 %v277
    %341 = vmatpush1.bf16.msra.mxu0 %v276
    %342 = vmatprep.subr.bf16.mxu0 %v279
    %343 = vmatpush1.bf16.msra.mxu0 %v278
    %344 = vmatprep.subr.bf16.mxu0 %v281
    %345 = vmatpush1.bf16.msra.mxu0 %v280
    %346 = vmatprep.subr.bf16.mxu0 %v283
    %347 = vmatpush1.bf16.msra.mxu0 %v282
    %348 = vmatprep.subr.bf16.mxu0 %v285
    %349 = vmatpush1.bf16.msra.mxu0 %v284
    %350 = vmatprep.subr.bf16.mxu0 %v287
    %351 = vmatpush1.bf16.msra.mxu0 %v286
    %352 = vmatprep.subr.bf16.mxu0 %v289
    %353 = vmatpush1.bf16.msra.mxu0 %v288
    %354 = vmatprep.subr.bf16.mxu0 %v291
    %355 = vmatpush1.bf16.msra.mxu0 %v290
    %356 = vmatprep.subr.bf16.mxu0 %v293
    %357 = vmatpush1.bf16.msra.mxu0 %v292
    %358 = vmatprep.subr.bf16.mxu0 %v295
    %359 = vmatpush1.bf16.msra.mxu0 %v294
    %360 = vmatprep.subr.bf16.mxu0 %v297
    %361 = vmatpush1.bf16.msra.mxu0 %v296
    %362 = vmatprep.subr.bf16.mxu0 %v299
    %363 = vmatpush1.bf16.msra.mxu0 %v298
    %364 = vmatprep.subr.bf16.mxu0 %v301
    %365 = vmatpush1.bf16.msra.mxu0 %v300
    %366 = vmatprep.subr.bf16.mxu0 %v303
    %367 = vmatpush1.bf16.msra.mxu0 %v302
    %368 = vmatprep.mubr.bf16.mxu0 %v145
    %369 = vmatmul.mubr.bf16.gmra.mrb[0].mxu0 %v144
    %v370 = vpop.f32.mrb[0].mxu0
    %v371 = vadd.f32 %v89, %v370
    %v372 = vpop.f32.mrb[0].mxu0
    %v373 = vadd.f32 %v93, %v372
    %v374 = vpop.f32.mrb[0].mxu0
    %v375 = vadd.f32 %v89, %v374
    %v376 = vpop.f32.mrb[0].mxu0
    %v377 = vadd.f32 %v93, %v376
    %378 = vmatprep.mubr.bf16.mxu0 %v147
    %379 = vmatmul.mubr.bf16.gmra.mrb[0].mxu0 %v146
    %v380 = vpop.f32.mrb[0].mxu0
    %v381 = vadd.f32 %v89, %v380
    %v382 = vpop.f32.mrb[0].mxu0
    %v383 = vadd.f32 %v93, %v382
    %v384 = vpop.f32.mrb[0].mxu0
    %v385 = vadd.f32 %v89, %v384
    %v386 = vpop.f32.mrb[0].mxu0
    %v387 = vadd.f32 %v93, %v386
    %388 = vmatprep.mubr.bf16.mxu0 %v149
    %389 = vmatmul.mubr.bf16.gmra.mrb[0].mxu0 %v148
    %v390 = vpop.f32.mrb[0].mxu0
    %v391 = vadd.f32 %v89, %v390
    %v392 = vpop.f32.mrb[0].mxu0
    %v393 = vadd.f32 %v93, %v392
    %v394 = vpop.f32.mrb[0].mxu0
    %v395 = vadd.f32 %v89, %v394
    %v396 = vpop.f32.mrb[0].mxu0
    %v397 = vadd.f32 %v93, %v396
    %398 = vmatprep.mubr.bf16.mxu0 %v151
    %399 = vmatmul.mubr.bf16.gmra.mrb[0].mxu0 %v150
    %v400 = vpop.f32.mrb[0].mxu0
    %v401 = vadd.f32 %v89, %v400
    %v402 = vpop.f32.mrb[0].mxu0
    %v403 = vadd.f32 %v93, %v402
    %v404 = vpop.f32.mrb[0].mxu0
    %v405 = vadd.f32 %v89, %v404
    %v406 = vpop.f32.mrb[0].mxu0
    %v407 = vadd.f32 %v93, %v406
    %408 = vmatprep.mubr.bf16.mxu0 %v153
    %409 = vmatmul.mubr.bf16.gmra.mrb[0].mxu0 %v152
    %v410 = vpop.f32.mrb[0].mxu0
    %v411 = vadd.f32 %v89, %v410
    %v412 = vpop.f32.mrb[0].mxu0
    %v413 = vadd.f32 %v93, %v412
    %v414 = vpop.f32.mrb[0].mxu0
    %v415 = vadd.f32 %v89, %v414
    %v416 = vpop.f32.mrb[0].mxu0
    %v417 = vadd.f32 %v93, %v416
    %418 = vmatprep.mubr.bf16.mxu0 %v155
    %419 = vmatmul.mubr.bf16.gmra.mrb[0].mxu0 %v154
    %v420 = vpop.f32.mrb[0].mxu0
    %v421 = vadd.f32 %v89, %v420
    %v422 = vpop.f32.mrb[0].mxu0
    %v423 = vadd.f32 %v93, %v422
    %v424 = vpop.f32.mrb[0].mxu0
    %v425 = vadd.f32 %v89, %v424
    %v426 = vpop.f32.mrb[0].mxu0
    %v427 = vadd.f32 %v93, %v426
    %428 = vmatprep.mubr.bf16.mxu0 %v157
    %429 = vmatmul.mubr.bf16.gmra.mrb[0].mxu0 %v156
    %v430 = vpop.f32.mrb[0].mxu0
    %v431 = vadd.f32 %v89, %v430
    %v432 = vpop.f32.mrb[0].mxu0
    %v433 = vadd.f32 %v93, %v432
    %v434 = vpop.f32.mrb[0].mxu0
    %v435 = vadd.f32 %v89, %v434
    %v436 = vpop.f32.mrb[0].mxu0
    %v437 = vadd.f32 %v93, %v436
    %438 = vmatprep.mubr.bf16.mxu0 %v159
    %439 = vmatmul.mubr.bf16.gmra.mrb[0].mxu0 %v158
    %v440 = vpop.f32.mrb[0].mxu0
    %v441 = vadd.f32 %v89, %v440
    %v442 = vpop.f32.mrb[0].mxu0
    %v443 = vadd.f32 %v93, %v442
    %v444 = vpop.f32.mrb[0].mxu0
    %v445 = vadd.f32 %v89, %v444
    %v446 = vpop.f32.mrb[0].mxu0
    %v447 = vadd.f32 %v93, %v446
    %448 = vdwg.mxu0
    %v449 = vtanh.pop %v371
    %v450 = vtanh.pop %v373
    %v451 = vtanh.pop %v375
    %v452 = vtanh.pop %v377
    %v453 = vtanh.pop %v381
    %v454 = vtanh.pop %v383
    %v455 = vtanh.pop %v385
    %v456 = vtanh.pop %v387
    %v457 = vtanh.pop %v391
    %v458 = vtanh.pop %v393
    %v459 = vtanh.pop %v395
    %v460 = vtanh.pop %v397
    %v461 = vtanh.pop %v401
    %v462 = vtanh.pop %v403
    %v463 = vtanh.pop %v405
    %v464 = vtanh.pop %v407
    %v465 = vtanh.pop %v411
    %v466 = vtanh.pop %v413
    %v467 = vtanh.pop %v415
    %v468 = vtanh.pop %v417
    %v469 = vtanh.pop %v421
    %v470 = vtanh.pop %v423
    %v471 = vtanh.pop %v425
    %v472 = vtanh.pop %v427
    %v473 = vtanh.pop %v431
    %v474 = vtanh.pop %v433
    %v475 = vtanh.pop %v435
    %v476 = vtanh.pop %v437
    %v477 = vtanh.pop %v441
    %v478 = vtanh.pop %v443
    %v479 = vtanh.pop %v445
    %v480 = vtanh.pop %v447
    %v481 = vpack.c.bf16 %v451, %v449
    %v482 = vpack.c.bf16 %v452, %v450
    %v483 = vpack.c.bf16 %v455, %v453
    %v484 = vpack.c.bf16 %v456, %v454
    %v485 = vpack.c.bf16 %v459, %v457
    %v486 = vpack.c.bf16 %v460, %v458
    %v487 = vpack.c.bf16 %v463, %v461
    %v488 = vpack.c.bf16 %v464, %v462
    %v489 = vpack.c.bf16 %v467, %v465
    %v490 = vpack.c.bf16 %v468, %v466
    %v491 = vpack.c.bf16 %v471, %v469
    %v492 = vpack.c.bf16 %v472, %v470
    %v493 = vpack.c.bf16 %v475, %v473
    %v494 = vpack.c.bf16 %v476, %v474
    %v495 = vpack.c.bf16 %v479, %v477
    %v496 = vpack.c.bf16 %v480, %v478
    %v497 = vld [vmem:[%s4] sm:$0xf]
    %v498 = vld [vmem:[%s4 + $0x4] sm:$0xf]
    %v499 = vld [vmem:[%s4 + $0x8] sm:$0xf]
    %v500 = vld [vmem:[%s4 + $0xc] sm:$0xf]
    %v501 = vld [vmem:[%s4 + $0x10] sm:$0xf]
    %v502 = vld [vmem:[%s4 + $0x14] sm:$0xf]
    %v503 = vld [vmem:[%s4 + $0x18] sm:$0xf]
    %v504 = vld [vmem:[%s4 + $0x1c] sm:$0xf]
    %v505 = vld [vmem:[%s4 + $0x20] sm:$0xf]
    %v506 = vld [vmem:[%s4 + $0x24] sm:$0xf]
    %v507 = vld [vmem:[%s4 + $0x28] sm:$0xf]
    %v508 = vld [vmem:[%s4 + $0x2c] sm:$0xf]
    %v509 = vld [vmem:[%s4 + $0x30] sm:$0xf]
    %v510 = vld [vmem:[%s4 + $0x34] sm:$0xf]
    %v511 = vld [vmem:[%s4 + $0x38] sm:$0xf]
    %v512 = vld [vmem:[%s4 + $0x3c] sm:$0xf]
    %v513 = vld [vmem:[%s4 + $0x40] sm:$0xf]
    %v514 = vld [vmem:[%s4 + $0x44] sm:$0xf]
    %v515 = vld [vmem:[%s4 + $0x48] sm:$0xf]
    %v516 = vld [vmem:[%s4 + $0x4c] sm:$0xf]
    %v517 = vld [vmem:[%s4 + $0x50] sm:$0xf]
    %v518 = vld [vmem:[%s4 + $0x54] sm:$0xf]
    %v519 = vld [vmem:[%s4 + $0x58] sm:$0xf]
    %v520 = vld [vmem:[%s4 + $0x5c] sm:$0xf]
    %v521 = vld [vmem:[%s4 + $0x60] sm:$0xf]
    %v522 = vld [vmem:[%s4 + $0x64] sm:$0xf]
    %v523 = vld [vmem:[%s4 + $0x68] sm:$0xf]
    %v524 = vld [vmem:[%s4 + $0x6c] sm:$0xf]
    %v525 = vld [vmem:[%s4 + $0x70] sm:$0xf]
    %v526 = vld [vmem:[%s4 + $0x74] sm:$0xf]
    %v527 = vld [vmem:[%s4 + $0x78] sm:$0xf]
    %v528 = vld [vmem:[%s4 + $0x7c] sm:$0xf]
    %v529 = vld [vmem:[%s5] sm:$0x1]
    %v531 = vlaneseq
    %v532 = vshrl.u32 %v531, 7
    %v533 = vsub.s32 0, %v532
    %v534 = vrot.slane %v529, %v533
    %v568 = vunpack.c.l.b16 %v497
    %v569 = vunpack.c.l.b16 %v498
    %v570 = vunpack.c.l.b16 %v499
    %v571 = vunpack.c.l.b16 %v500
    %v572 = vunpack.c.l.b16 %v501
    %v573 = vunpack.c.l.b16 %v502
    %v574 = vunpack.c.l.b16 %v503
    %v575 = vunpack.c.l.b16 %v504
    %v576 = vunpack.c.l.b16 %v505
    %v577 = vunpack.c.l.b16 %v506
    %v578 = vunpack.c.l.b16 %v507
    %v579 = vunpack.c.l.b16 %v508
    %v580 = vunpack.c.l.b16 %v509
    %v581 = vunpack.c.l.b16 %v510
    %v582 = vunpack.c.l.b16 %v511
    %v583 = vunpack.c.l.b16 %v512
    %v584 = vunpack.c.l.b16 %v513
    %v585 = vunpack.c.l.b16 %v514
    %v586 = vunpack.c.l.b16 %v515
    %v587 = vunpack.c.l.b16 %v516
    %v588 = vunpack.c.l.b16 %v517
    %v589 = vunpack.c.l.b16 %v518
    %v590 = vunpack.c.l.b16 %v519
    %v591 = vunpack.c.l.b16 %v520
    %v592 = vunpack.c.l.b16 %v521
    %v593 = vunpack.c.l.b16 %v522
    %v594 = vunpack.c.l.b16 %v523
    %v595 = vunpack.c.l.b16 %v524
    %v596 = vunpack.c.l.b16 %v525
    %v597 = vunpack.c.l.b16 %v526
    %v598 = vunpack.c.l.b16 %v527
    %v599 = vunpack.c.l.b16 %v528
    %v600 = vpack.c.b16 %v569, %v568
    %v601 = vpack.c.b16 %v571, %v570
    %v602 = vpack.c.b16 %v573, %v572
    %v603 = vpack.c.b16 %v575, %v574
    %v604 = vpack.c.b16 %v577, %v576
    %v605 = vpack.c.b16 %v579, %v578
    %v606 = vpack.c.b16 %v581, %v580
    %v607 = vpack.c.b16 %v583, %v582
    %v608 = vpack.c.b16 %v585, %v584
    %v609 = vpack.c.b16 %v587, %v586
    %v610 = vpack.c.b16 %v589, %v588
    %v611 = vpack.c.b16 %v591, %v590
    %v612 = vpack.c.b16 %v593, %v592
    %v613 = vpack.c.b16 %v595, %v594
    %v614 = vpack.c.b16 %v597, %v596
    %v615 = vpack.c.b16 %v599, %v598
    %632 = vmatprep.subr.bf16.mxu0 0
    %633 = vmatpush1.bf16.msra.mxu0 %v600
    %634 = vmatprep.subr.bf16.mxu0 0
    %635 = vmatpush1.bf16.msra.mxu0 %v601
    %636 = vmatprep.subr.bf16.mxu0 0
    %637 = vmatpush1.bf16.msra.mxu0 %v602
    %638 = vmatprep.subr.bf16.mxu0 0
    %639 = vmatpush1.bf16.msra.mxu0 %v603
    %640 = vmatprep.subr.bf16.mxu0 0
    %641 = vmatpush1.bf16.msra.mxu0 %v604
    %642 = vmatprep.subr.bf16.mxu0 0
    %643 = vmatpush1.bf16.msra.mxu0 %v605
    %644 = vmatprep.subr.bf16.mxu0 0
    %645 = vmatpush1.bf16.msra.mxu0 %v606
    %646 = vmatprep.subr.bf16.mxu0 0
    %647 = vmatpush1.bf16.msra.mxu0 %v607
    %648 = vmatprep.subr.bf16.mxu0 0
    %649 = vmatpush1.bf16.msra.mxu0 %v608
    %650 = vmatprep.subr.bf16.mxu0 0
    %651 = vmatpush1.bf16.msra.mxu0 %v609
    %652 = vmatprep.subr.bf16.mxu0 0
    %653 = vmatpush1.bf16.msra.mxu0 %v610
    %654 = vmatprep.subr.bf16.mxu0 0
    %655 = vmatpush1.bf16.msra.mxu0 %v611
    %656 = vmatprep.subr.bf16.mxu0 0
    %657 = vmatpush1.bf16.msra.mxu0 %v612
    %658 = vmatprep.subr.bf16.mxu0 0
    %659 = vmatpush1.bf16.msra.mxu0 %v613
    %660 = vmatprep.subr.bf16.mxu0 0
    %661 = vmatpush1.bf16.msra.mxu0 %v614
    %662 = vmatprep.subr.bf16.mxu0 0
    %663 = vmatpush1.bf16.msra.mxu0 %v615
    %664 = vmatprep.mubr.bf16.mxu0 %v482
    %665 = vmatmul.mubr.bf16.gmra.mrb[0].mxu0 %v481
    %v666 = vpop.f32.mrb[0].mxu0
    %v667 = vadd.f32 %v534, %v666
    %v668 = vpop.f32.mrb[0].mxu0
    %v669 = vpop.f32.mrb[0].mxu0
    %v670 = vadd.f32 %v534, %v669
    %v671 = vpop.f32.mrb[0].mxu0
    %672 = vmatprep.mubr.bf16.mxu0 %v484
    %673 = vmatmul.mubr.bf16.gmra.mrb[0].mxu0 %v483
    %v674 = vpop.f32.mrb[0].mxu0
    %v675 = vadd.f32 %v534, %v674
    %v676 = vpop.f32.mrb[0].mxu0
    %v677 = vpop.f32.mrb[0].mxu0
    %v678 = vadd.f32 %v534, %v677
    %v679 = vpop.f32.mrb[0].mxu0
    %680 = vmatprep.mubr.bf16.mxu0 %v486
    %681 = vmatmul.mubr.bf16.gmra.mrb[0].mxu0 %v485
    %v682 = vpop.f32.mrb[0].mxu0
    %v683 = vadd.f32 %v534, %v682
    %v684 = vpop.f32.mrb[0].mxu0
    %v685 = vpop.f32.mrb[0].mxu0
    %v686 = vadd.f32 %v534, %v685
    %v687 = vpop.f32.mrb[0].mxu0
    %688 = vmatprep.mubr.bf16.mxu0 %v488
    %689 = vmatmul.mubr.bf16.gmra.mrb[0].mxu0 %v487
    %v690 = vpop.f32.mrb[0].mxu0
    %v691 = vadd.f32 %v534, %v690
    %v692 = vpop.f32.mrb[0].mxu0
    %v693 = vpop.f32.mrb[0].mxu0
    %v694 = vadd.f32 %v534, %v693
    %v695 = vpop.f32.mrb[0].mxu0
    %696 = vmatprep.mubr.bf16.mxu0 %v490
    %697 = vmatmul.mubr.bf16.gmra.mrb[0].mxu0 %v489
    %v698 = vpop.f32.mrb[0].mxu0
    %v699 = vadd.f32 %v534, %v698
    %v700 = vpop.f32.mrb[0].mxu0
    %v701 = vpop.f32.mrb[0].mxu0
    %v702 = vadd.f32 %v534, %v701
    %v703 = vpop.f32.mrb[0].mxu0
    %704 = vmatprep.mubr.bf16.mxu0 %v492
    %705 = vmatmul.mubr.bf16.gmra.mrb[0].mxu0 %v491
    %v706 = vpop.f32.mrb[0].mxu0
    %v707 = vadd.f32 %v534, %v706
    %v708 = vpop.f32.mrb[0].mxu0
    %v709 = vpop.f32.mrb[0].mxu0
    %v710 = vadd.f32 %v534, %v709
    %v711 = vpop.f32.mrb[0].mxu0
    %712 = vmatprep.mubr.bf16.mxu0 %v494
    %713 = vmatmul.mubr.bf16.gmra.mrb[0].mxu0 %v493
    %v714 = vpop.f32.mrb[0].mxu0
    %v715 = vadd.f32 %v534, %v714
    %v716 = vpop.f32.mrb[0].mxu0
    %v717 = vpop.f32.mrb[0].mxu0
    %v718 = vadd.f32 %v534, %v717
    %v719 = vpop.f32.mrb[0].mxu0
    %720 = vmatprep.mubr.bf16.mxu0 %v496
    %721 = vmatmul.mubr.bf16.gmra.mrb[0].mxu0 %v495
    %v722 = vpop.f32.mrb[0].mxu0
    %v723 = vadd.f32 %v534, %v722
    %v724 = vpop.f32.mrb[0].mxu0
    %v725 = vpop.f32.mrb[0].mxu0
    %v726 = vadd.f32 %v534, %v725
    %v727 = vpop.f32.mrb[0].mxu0
    %728 = vdwg.mxu0
    %v729 = vtanh.pop %v667
    %v730 = vtanh.pop %v670
    %v731 = vtanh.pop %v675
    %v732 = vtanh.pop %v678
    %v733 = vtanh.pop %v683
    %v734 = vtanh.pop %v686
    %v735 = vtanh.pop %v691
    %v736 = vtanh.pop %v694
    %v737 = vtanh.pop %v699
    %v738 = vtanh.pop %v702
    %v739 = vtanh.pop %v707
    %v740 = vtanh.pop %v710
    %v741 = vtanh.pop %v715
    %v742 = vtanh.pop %v718
    %v743 = vtanh.pop %v723
    %v744 = vtanh.pop %v726
    %v745 = vpack.c.bf16 %v730, %v729
    %v746 = vpack.c.bf16 %v732, %v731
    %v747 = vpack.c.bf16 %v734, %v733
    %v748 = vpack.c.bf16 %v736, %v735
    %v749 = vpack.c.bf16 %v738, %v737
    %v750 = vpack.c.bf16 %v740, %v739
    %v751 = vpack.c.bf16 %v742, %v741
    %v752 = vpack.c.bf16 %v744, %v743
    %v753 = vld [vmem:[%s6] sm:$0xf]
    %v754 = vld [vmem:[%s6 + $0x4] sm:$0xf]
    %v755 = vld [vmem:[%s6 + $0x8] sm:$0xf]
    %v756 = vld [vmem:[%s6 + $0xc] sm:$0xf]
    %v757 = vld [vmem:[%s6 + $0x10] sm:$0xf]
    %v758 = vld [vmem:[%s6 + $0x14] sm:$0xf]
    %v759 = vld [vmem:[%s6 + $0x18] sm:$0xf]
    %v760 = vld [vmem:[%s6 + $0x1c] sm:$0xf]
    %v761 = vld [vmem:[%s6 + $0x20] sm:$0xf]
    %v762 = vld [vmem:[%s6 + $0x24] sm:$0xf]
    %v763 = vld [vmem:[%s6 + $0x28] sm:$0xf]
    %v764 = vld [vmem:[%s6 + $0x2c] sm:$0xf]
    %v765 = vld [vmem:[%s6 + $0x30] sm:$0xf]
    %v766 = vld [vmem:[%s6 + $0x34] sm:$0xf]
    %v767 = vld [vmem:[%s6 + $0x38] sm:$0xf]
    %v768 = vld [vmem:[%s6 + $0x3c] sm:$0xf]
    %v769 = vld [vmem:[%s7] sm:$0x1]
    %v771 = vlaneseq
    %v772 = vshrl.u32 %v771, 7
    %v773 = vsub.s32 0, %v772
    %v774 = vrot.slane %v769, %v773
    %v792 = vunpack.c.l.b16 %v753
    %v793 = vunpack.c.l.b16 %v754
    %v794 = vunpack.c.l.b16 %v755
    %v795 = vunpack.c.l.b16 %v756
    %v796 = vunpack.c.l.b16 %v757
    %v797 = vunpack.c.l.b16 %v758
    %v798 = vunpack.c.l.b16 %v759
    %v799 = vunpack.c.l.b16 %v760
    %v800 = vunpack.c.l.b16 %v761
    %v801 = vunpack.c.l.b16 %v762
    %v802 = vunpack.c.l.b16 %v763
    %v803 = vunpack.c.l.b16 %v764
    %v804 = vunpack.c.l.b16 %v765
    %v805 = vunpack.c.l.b16 %v766
    %v806 = vunpack.c.l.b16 %v767
    %v807 = vunpack.c.l.b16 %v768
    %v808 = vpack.c.b16 %v793, %v792
    %v809 = vpack.c.b16 %v795, %v794
    %v810 = vpack.c.b16 %v797, %v796
    %v811 = vpack.c.b16 %v799, %v798
    %v812 = vpack.c.b16 %v801, %v800
    %v813 = vpack.c.b16 %v803, %v802
    %v814 = vpack.c.b16 %v805, %v804
    %v815 = vpack.c.b16 %v807, %v806
    %824 = vmatprep.subr.bf16.mxu0 0
    %825 = vmatpush1.bf16.msra.mxu0 %v808
    %826 = vmatprep.subr.bf16.mxu0 0
    %827 = vmatpush1.bf16.msra.mxu0 %v809
    %828 = vmatprep.subr.bf16.mxu0 0
    %829 = vmatpush1.bf16.msra.mxu0 %v810
    %830 = vmatprep.subr.bf16.mxu0 0
    %831 = vmatpush1.bf16.msra.mxu0 %v811
    %832 = vmatprep.subr.bf16.mxu0 0
    %833 = vmatpush1.bf16.msra.mxu0 %v812
    %834 = vmatprep.subr.bf16.mxu0 0
    %835 = vmatpush1.bf16.msra.mxu0 %v813
    %836 = vmatprep.subr.bf16.mxu0 0
    %837 = vmatpush1.bf16.msra.mxu0 %v814
    %838 = vmatprep.subr.bf16.mxu0 0
    %839 = vmatpush1.bf16.msra.mxu0 %v815
    %840 = vmatprep.subr.bf16.mxu0 0
    %841 = vmatpush1.bf16.msra.mxu0 0
    %842 = vmatprep.subr.bf16.mxu0 0
    %843 = vmatpush1.bf16.msra.mxu0 0
    %844 = vmatprep.subr.bf16.mxu0 0
    %845 = vmatpush1.bf16.msra.mxu0 0
    %846 = vmatprep.subr.bf16.mxu0 0
    %847 = vmatpush1.bf16.msra.mxu0 0
    %848 = vmatprep.subr.bf16.mxu0 0
    %849 = vmatpush1.bf16.msra.mxu0 0
    %850 = vmatprep.subr.bf16.mxu0 0
    %851 = vmatpush1.bf16.msra.mxu0 0
    %852 = vmatprep.subr.bf16.mxu0 0
    %853 = vmatpush1.bf16.msra.mxu0 0
    %854 = vmatprep.subr.bf16.mxu0 0
    %855 = vmatpush1.bf16.msra.mxu0 0
    %856 = vmatprep.mubr.bf16.mxu0 0
    %857 = vmatmul.mubr.bf16.gmra.mrb[0].mxu0 %v745
    %v858 = vpop.f32.mrb[0].mxu0
    %v859 = vadd.f32 %v774, %v858
    %v860 = vpop.f32.mrb[0].mxu0
    %v861 = vpop.f32.mrb[0].mxu0
    %v862 = vadd.f32 %v774, %v861
    %v863 = vpop.f32.mrb[0].mxu0
    %864 = vmatprep.mubr.bf16.mxu0 0
    %865 = vmatmul.mubr.bf16.gmra.mrb[0].mxu0 %v746
    %v866 = vpop.f32.mrb[0].mxu0
    %v867 = vadd.f32 %v774, %v866
    %v868 = vpop.f32.mrb[0].mxu0
    %v869 = vpop.f32.mrb[0].mxu0
    %v870 = vadd.f32 %v774, %v869
    %v871 = vpop.f32.mrb[0].mxu0
    %872 = vmatprep.mubr.bf16.mxu0 0
    %873 = vmatmul.mubr.bf16.gmra.mrb[0].mxu0 %v747
    %v874 = vpop.f32.mrb[0].mxu0
    %v875 = vadd.f32 %v774, %v874
    %v876 = vpop.f32.mrb[0].mxu0
    %v877 = vpop.f32.mrb[0].mxu0
    %v878 = vadd.f32 %v774, %v877
    %v879 = vpop.f32.mrb[0].mxu0
    %880 = vmatprep.mubr.bf16.mxu0 0
    %881 = vmatmul.mubr.bf16.gmra.mrb[0].mxu0 %v748
    %v882 = vpop.f32.mrb[0].mxu0
    %v883 = vadd.f32 %v774, %v882
    %v884 = vpop.f32.mrb[0].mxu0
    %v885 = vpop.f32.mrb[0].mxu0
    %v886 = vadd.f32 %v774, %v885
    %v887 = vpop.f32.mrb[0].mxu0
    %888 = vmatprep.mubr.bf16.mxu0 0
    %889 = vmatmul.mubr.bf16.gmra.mrb[0].mxu0 %v749
    %v890 = vpop.f32.mrb[0].mxu0
    %v891 = vadd.f32 %v774, %v890
    %v892 = vpop.f32.mrb[0].mxu0
    %v893 = vpop.f32.mrb[0].mxu0
    %v894 = vadd.f32 %v774, %v893
    %v895 = vpop.f32.mrb[0].mxu0
    %896 = vmatprep.mubr.bf16.mxu0 0
    %897 = vmatmul.mubr.bf16.gmra.mrb[0].mxu0 %v750
    %v898 = vpop.f32.mrb[0].mxu0
    %v899 = vadd.f32 %v774, %v898
    %v900 = vpop.f32.mrb[0].mxu0
    %v901 = vpop.f32.mrb[0].mxu0
    %v902 = vadd.f32 %v774, %v901
    %v903 = vpop.f32.mrb[0].mxu0
    %904 = vmatprep.mubr.bf16.mxu0 0
    %905 = vmatmul.mubr.bf16.gmra.mrb[0].mxu0 %v751
    %v906 = vpop.f32.mrb[0].mxu0
    %v907 = vadd.f32 %v774, %v906
    %v908 = vpop.f32.mrb[0].mxu0
    %v909 = vpop.f32.mrb[0].mxu0
    %v910 = vadd.f32 %v774, %v909
    %v911 = vpop.f32.mrb[0].mxu0
    %912 = vmatprep.mubr.bf16.mxu0 0
    %913 = vmatmul.mubr.bf16.gmra.mrb[0].mxu0 %v752
    %v914 = vpop.f32.mrb[0].mxu0
    %v915 = vadd.f32 %v774, %v914
    %v916 = vpop.f32.mrb[0].mxu0
    %v917 = vpop.f32.mrb[0].mxu0
    %v918 = vadd.f32 %v774, %v917
    %v919 = vpop.f32.mrb[0].mxu0
    %920 = vdwg.mxu0
    %v921 = vadd.f32 %v859, %v862
    %v922 = vadd.f32 %v921, %v867
    %v923 = vadd.f32 %v922, %v870
    %v924 = vadd.f32 %v923, %v875
    %v925 = vadd.f32 %v924, %v878
    %v926 = vadd.f32 %v925, %v883
    %v927 = vadd.f32 %v926, %v886
    %v928 = vadd.f32 %v927, %v891
    %v929 = vadd.f32 %v928, %v894
    %v930 = vadd.f32 %v929, %v899
    %v931 = vadd.f32 %v930, %v902
    %v932 = vadd.f32 %v931, %v907
    %v933 = vadd.f32 %v932, %v910
    %v934 = vadd.f32 %v933, %v915
    %v935 = vadd.f32 %v934, %v918
    %v936 = vrot.slane %v935, 4
    %v937 = vadd.f32 %v935, %v936
    %v938 = vrot.slane %v937, 2
    %v939 = vadd.f32 %v937, %v938
    %v940 = vrot.slane %v939, 1
    %v941 = vadd.f32 %v939, %v940
    %v942 = vmul.f32 %v941, 0.0078125
    %v943 = vmul.f32 %v859, %v859
    %v944 = vmul.f32 %v862, %v862
    %v945 = vmul.f32 %v867, %v867
    %v946 = vmul.f32 %v870, %v870
    %v947 = vmul.f32 %v875, %v875
    %v948 = vmul.f32 %v878, %v878
    %v949 = vmul.f32 %v883, %v883
    %v950 = vmul.f32 %v886, %v886
    %v951 = vmul.f32 %v891, %v891
    %v952 = vmul.f32 %v894, %v894
    %v953 = vmul.f32 %v899, %v899
    %v954 = vmul.f32 %v902, %v902
    %v955 = vmul.f32 %v907, %v907
    %v956 = vmul.f32 %v910, %v910
    %v957 = vmul.f32 %v915, %v915
    %v958 = vmul.f32 %v918, %v918
    %v959 = vadd.f32 %v943, %v944
    %v960 = vadd.f32 %v959, %v945
    %v961 = vadd.f32 %v960, %v946
    %v962 = vadd.f32 %v961, %v947
    %v963 = vadd.f32 %v962, %v948
    %v964 = vadd.f32 %v963, %v949
    %v965 = vadd.f32 %v964, %v950
    %v966 = vadd.f32 %v965, %v951
    %v967 = vadd.f32 %v966, %v952
    %v968 = vadd.f32 %v967, %v953
    %v969 = vadd.f32 %v968, %v954
    %v970 = vadd.f32 %v969, %v955
    %v971 = vadd.f32 %v970, %v956
    %v972 = vadd.f32 %v971, %v957
    %v973 = vadd.f32 %v972, %v958
    %v974 = vrot.slane %v973, 4
    %v975 = vadd.f32 %v973, %v974
    %v976 = vrot.slane %v975, 2
    %v977 = vadd.f32 %v975, %v976
    %v978 = vrot.slane %v977, 1
    %v979 = vadd.f32 %v977, %v978
    %v980 = vmul.f32 %v979, 0.0078125
    %v981 = vmul.f32 %v942, %v942
    %v982 = vsub.f32 %v980, %v981
    %v983 = vmax.f32 %v982, 0.0
    %v984 = vsub.f32 %v859, %v942
    %v985 = vsub.f32 %v862, %v942
    %v986 = vsub.f32 %v867, %v942
    %v987 = vsub.f32 %v870, %v942
    %v988 = vsub.f32 %v875, %v942
    %v989 = vsub.f32 %v878, %v942
    %v990 = vsub.f32 %v883, %v942
    %v991 = vsub.f32 %v886, %v942
    %v992 = vsub.f32 %v891, %v942
    %v993 = vsub.f32 %v894, %v942
    %v994 = vsub.f32 %v899, %v942
    %v995 = vsub.f32 %v902, %v942
    %v996 = vsub.f32 %v907, %v942
    %v997 = vsub.f32 %v910, %v942
    %v998 = vsub.f32 %v915, %v942
    %v999 = vsub.f32 %v918, %v942
    %v1000 = vadd.f32 %v983, 1e-05
    %v1001 = vrsqrt.pop %v1000
    %v1002 = vmul.f32 %v984, %v1001
    %v1003 = vmul.f32 %v985, %v1001
    %v1004 = vmul.f32 %v986, %v1001
    %v1005 = vmul.f32 %v987, %v1001
    %v1006 = vmul.f32 %v988, %v1001
    %v1007 = vmul.f32 %v989, %v1001
    %v1008 = vmul.f32 %v990, %v1001
    %v1009 = vmul.f32 %v991, %v1001
    %v1010 = vmul.f32 %v992, %v1001
    %v1011 = vmul.f32 %v993, %v1001
    %v1012 = vmul.f32 %v994, %v1001
    %v1013 = vmul.f32 %v995, %v1001
    %v1014 = vmul.f32 %v996, %v1001
    %v1015 = vmul.f32 %v997, %v1001
    %v1016 = vmul.f32 %v998, %v1001
    %v1017 = vmul.f32 %v999, %v1001
    %v1018 = vmul.f32 %v1002, 0.5
    %v1019 = vmul.f32 %v1003, 0.5
    %v1020 = vmul.f32 %v1004, 0.5
    %v1021 = vmul.f32 %v1005, 0.5
    %v1022 = vmul.f32 %v1006, 0.5
    %v1023 = vmul.f32 %v1007, 0.5
    %v1024 = vmul.f32 %v1008, 0.5
    %v1025 = vmul.f32 %v1009, 0.5
    %v1026 = vmul.f32 %v1010, 0.5
    %v1027 = vmul.f32 %v1011, 0.5
    %v1028 = vmul.f32 %v1012, 0.5
    %v1029 = vmul.f32 %v1013, 0.5
    %v1030 = vmul.f32 %v1014, 0.5
    %v1031 = vmul.f32 %v1015, 0.5
    %v1032 = vmul.f32 %v1016, 0.5
    %v1033 = vmul.f32 %v1017, 0.5
    %v1034 = vmul.f32 %v1018, 1.442695
    %v1035 = vpow.pop %v1034
    %v1036 = vmul.f32 %v1019, 1.442695
    %v1037 = vpow.pop %v1036
    %v1038 = vmul.f32 %v1020, 1.442695
    %v1039 = vpow.pop %v1038
    %v1040 = vmul.f32 %v1021, 1.442695
    %v1041 = vpow.pop %v1040
    %v1042 = vmul.f32 %v1022, 1.442695
    %v1043 = vpow.pop %v1042
    %v1044 = vmul.f32 %v1023, 1.442695
    %v1045 = vpow.pop %v1044
    %v1046 = vmul.f32 %v1024, 1.442695
    %v1047 = vpow.pop %v1046
    %v1048 = vmul.f32 %v1025, 1.442695
    %v1049 = vpow.pop %v1048
    %v1050 = vmul.f32 %v1026, 1.442695
    %v1051 = vpow.pop %v1050
    %v1052 = vmul.f32 %v1027, 1.442695
    %v1053 = vpow.pop %v1052
    %v1054 = vmul.f32 %v1028, 1.442695
    %v1055 = vpow.pop %v1054
    %v1056 = vmul.f32 %v1029, 1.442695
    %v1057 = vpow.pop %v1056
    %v1058 = vmul.f32 %v1030, 1.442695
    %v1059 = vpow.pop %v1058
    %v1060 = vmul.f32 %v1031, 1.442695
    %v1061 = vpow.pop %v1060
    %v1062 = vmul.f32 %v1032, 1.442695
    %v1063 = vpow.pop %v1062
    %v1064 = vmul.f32 %v1033, 1.442695
    %v1065 = vpow.pop %v1064
    %v1066 = vmul.f32 %v1035, %v1035
    %v1067 = vmul.f32 %v1037, %v1037
    %v1068 = vmul.f32 %v1039, %v1039
    %v1069 = vmul.f32 %v1041, %v1041
    %v1070 = vmul.f32 %v1043, %v1043
    %v1071 = vmul.f32 %v1045, %v1045
    %v1072 = vmul.f32 %v1047, %v1047
    %v1073 = vmul.f32 %v1049, %v1049
    %v1074 = vmul.f32 %v1051, %v1051
    %v1075 = vmul.f32 %v1053, %v1053
    %v1076 = vmul.f32 %v1055, %v1055
    %v1077 = vmul.f32 %v1057, %v1057
    %v1078 = vmul.f32 %v1059, %v1059
    %v1079 = vmul.f32 %v1061, %v1061
    %v1080 = vmul.f32 %v1063, %v1063
    %v1081 = vmul.f32 %v1065, %v1065
    %v1082 = vld [vmem:[%s1] sm:$0xff]
    %v1083 = vld [vmem:[%s1 + $0x8] sm:$0xff]
    %v1084 = vld [vmem:[%s1 + $0x10] sm:$0xff]
    %v1085 = vld [vmem:[%s1 + $0x18] sm:$0xff]
    %v1086 = vld [vmem:[%s1 + $0x20] sm:$0xff]
    %v1087 = vld [vmem:[%s1 + $0x28] sm:$0xff]
    %v1088 = vld [vmem:[%s1 + $0x30] sm:$0xff]
    %v1089 = vld [vmem:[%s1 + $0x38] sm:$0xff]
    %v1090 = vld [vmem:[%s1 + $0x40] sm:$0xff]
    %v1091 = vld [vmem:[%s1 + $0x48] sm:$0xff]
    %v1092 = vld [vmem:[%s1 + $0x50] sm:$0xff]
    %v1093 = vld [vmem:[%s1 + $0x58] sm:$0xff]
    %v1094 = vld [vmem:[%s1 + $0x60] sm:$0xff]
    %v1095 = vld [vmem:[%s1 + $0x68] sm:$0xff]
    %v1096 = vld [vmem:[%s1 + $0x70] sm:$0xff]
    %v1097 = vld [vmem:[%s1 + $0x78] sm:$0xff]
    %1114 = vrot.lane.b32.xlu0 %v1035, 96
    %v1115 = vpop.permute.xlu0 %1114
    %1116 = vrot.lane.b32.xlu0 %v1037, 96
    %v1117 = vpop.permute.xlu0 %1116
    %1118 = vrot.lane.b32.xlu0 %v1039, 96
    %v1119 = vpop.permute.xlu0 %1118
    %1120 = vrot.lane.b32.xlu0 %v1041, 96
    %v1121 = vpop.permute.xlu0 %1120
    %1122 = vrot.lane.b32.xlu0 %v1043, 96
    %v1123 = vpop.permute.xlu0 %1122
    %1124 = vrot.lane.b32.xlu0 %v1045, 96
    %v1125 = vpop.permute.xlu0 %1124
    %1126 = vrot.lane.b32.xlu0 %v1047, 96
    %v1127 = vpop.permute.xlu0 %1126
    %1128 = vrot.lane.b32.xlu0 %v1049, 96
    %v1129 = vpop.permute.xlu0 %1128
    %1130 = vrot.lane.b32.xlu0 %v1051, 96
    %v1131 = vpop.permute.xlu0 %1130
    %1132 = vrot.lane.b32.xlu0 %v1053, 96
    %v1133 = vpop.permute.xlu0 %1132
    %1134 = vrot.lane.b32.xlu0 %v1055, 96
    %v1135 = vpop.permute.xlu0 %1134
    %1136 = vrot.lane.b32.xlu0 %v1057, 96
    %v1137 = vpop.permute.xlu0 %1136
    %1138 = vrot.lane.b32.xlu0 %v1059, 96
    %v1139 = vpop.permute.xlu0 %1138
    %1140 = vrot.lane.b32.xlu0 %v1061, 96
    %v1141 = vpop.permute.xlu0 %1140
    %1142 = vrot.lane.b32.xlu0 %v1063, 96
    %v1143 = vpop.permute.xlu0 %1142
    %1144 = vrot.lane.b32.xlu0 %v1065, 96
    %v1145 = vpop.permute.xlu0 %1144
    %v1162 = vmul.f32 %v1082, %v1115
    %v1163 = vmul.f32 %v1083, %v1117
    %v1164 = vmul.f32 %v1084, %v1119
    %v1165 = vmul.f32 %v1085, %v1121
    %v1166 = vmul.f32 %v1086, %v1123
    %v1167 = vmul.f32 %v1087, %v1125
    %v1168 = vmul.f32 %v1088, %v1127
    %v1169 = vmul.f32 %v1089, %v1129
    %v1170 = vmul.f32 %v1090, %v1131
    %v1171 = vmul.f32 %v1091, %v1133
    %v1172 = vmul.f32 %v1092, %v1135
    %v1173 = vmul.f32 %v1093, %v1137
    %v1174 = vmul.f32 %v1094, %v1139
    %v1175 = vmul.f32 %v1095, %v1141
    %v1176 = vmul.f32 %v1096, %v1143
    %v1177 = vmul.f32 %v1097, %v1145
    %v1178 = vadd.f32 %v1002, %v1162
    %v1179 = vadd.f32 %v1003, %v1163
    %v1180 = vadd.f32 %v1004, %v1164
    %v1181 = vadd.f32 %v1005, %v1165
    %v1182 = vadd.f32 %v1006, %v1166
    %v1183 = vadd.f32 %v1007, %v1167
    %v1184 = vadd.f32 %v1008, %v1168
    %v1185 = vadd.f32 %v1009, %v1169
    %v1186 = vadd.f32 %v1010, %v1170
    %v1187 = vadd.f32 %v1011, %v1171
    %v1188 = vadd.f32 %v1012, %v1172
    %v1189 = vadd.f32 %v1013, %v1173
    %v1190 = vadd.f32 %v1014, %v1174
    %v1191 = vadd.f32 %v1015, %v1175
    %v1192 = vadd.f32 %v1016, %v1176
    %v1193 = vadd.f32 %v1017, %v1177
    %vm1194 = vcmask 261120
    %v1195 = vsel %vm1194, %v1178, -inf
    %1196 = vmax.xlane.f32.xlu0 %v1195
    %v1197 = vpop.xlane.xlu0 %1196
    %v1198 = vsel %vm1194, %v1179, -inf
    %1199 = vmax.xlane.f32.xlu0 %v1198
    %v1200 = vpop.xlane.xlu0 %1199
    %v1201 = vsel %vm1194, %v1180, -inf
    %1202 = vmax.xlane.f32.xlu0 %v1201
    %v1203 = vpop.xlane.xlu0 %1202
    %v1204 = vsel %vm1194, %v1181, -inf
    %1205 = vmax.xlane.f32.xlu0 %v1204
    %v1206 = vpop.xlane.xlu0 %1205
    %v1207 = vsel %vm1194, %v1182, -inf
    %1208 = vmax.xlane.f32.xlu0 %v1207
    %v1209 = vpop.xlane.xlu0 %1208
    %v1210 = vsel %vm1194, %v1183, -inf
    %1211 = vmax.xlane.f32.xlu0 %v1210
    %v1212 = vpop.xlane.xlu0 %1211
    %v1213 = vsel %vm1194, %v1184, -inf
    %1214 = vmax.xlane.f32.xlu0 %v1213
    %v1215 = vpop.xlane.xlu0 %1214
    %v1216 = vsel %vm1194, %v1185, -inf
    %1217 = vmax.xlane.f32.xlu0 %v1216
    %v1218 = vpop.xlane.xlu0 %1217
    %v1219 = vsel %vm1194, %v1186, -inf
    %1220 = vmax.xlane.f32.xlu0 %v1219
    %v1221 = vpop.xlane.xlu0 %1220
    %v1222 = vsel %vm1194, %v1187, -inf
    %1223 = vmax.xlane.f32.xlu0 %v1222
    %v1224 = vpop.xlane.xlu0 %1223
    %v1225 = vsel %vm1194, %v1188, -inf
    %1226 = vmax.xlane.f32.xlu0 %v1225
    %v1227 = vpop.xlane.xlu0 %1226
    %v1228 = vsel %vm1194, %v1189, -inf
    %1229 = vmax.xlane.f32.xlu0 %v1228
    %v1230 = vpop.xlane.xlu0 %1229
    %v1231 = vsel %vm1194, %v1190, -inf
    %1232 = vmax.xlane.f32.xlu0 %v1231
    %v1233 = vpop.xlane.xlu0 %1232
    %v1234 = vsel %vm1194, %v1191, -inf
    %1235 = vmax.xlane.f32.xlu0 %v1234
    %v1236 = vpop.xlane.xlu0 %1235
    %v1237 = vsel %vm1194, %v1192, -inf
    %1238 = vmax.xlane.f32.xlu0 %v1237
    %v1239 = vpop.xlane.xlu0 %1238
    %v1240 = vsel %vm1194, %v1193, -inf
    %1241 = vmax.xlane.f32.xlu0 %v1240
    %v1242 = vpop.xlane.xlu0 %1241
    %v1243 = vsub.f32 %v1178, %v1197
    %v1244 = vsub.f32 %v1179, %v1200
    %v1245 = vsub.f32 %v1180, %v1203
    %v1246 = vsub.f32 %v1181, %v1206
    %v1247 = vsub.f32 %v1182, %v1209
    %v1248 = vsub.f32 %v1183, %v1212
    %v1249 = vsub.f32 %v1184, %v1215
    %v1250 = vsub.f32 %v1185, %v1218
    %v1251 = vsub.f32 %v1186, %v1221
    %v1252 = vsub.f32 %v1187, %v1224
    %v1253 = vsub.f32 %v1188, %v1227
    %v1254 = vsub.f32 %v1189, %v1230
    %v1255 = vsub.f32 %v1190, %v1233
    %v1256 = vsub.f32 %v1191, %v1236
    %v1257 = vsub.f32 %v1192, %v1239
    %v1258 = vsub.f32 %v1193, %v1242
    %v1259 = vmul.f32 %v1243, 1.442695
    %v1260 = vpow.pop %v1259
    %v1261 = vmul.f32 %v1244, 1.442695
    %v1262 = vpow.pop %v1261
    %v1263 = vmul.f32 %v1245, 1.442695
    %v1264 = vpow.pop %v1263
    %v1265 = vmul.f32 %v1246, 1.442695
    %v1266 = vpow.pop %v1265
    %v1267 = vmul.f32 %v1247, 1.442695
    %v1268 = vpow.pop %v1267
    %v1269 = vmul.f32 %v1248, 1.442695
    %v1270 = vpow.pop %v1269
    %v1271 = vmul.f32 %v1249, 1.442695
    %v1272 = vpow.pop %v1271
    %v1273 = vmul.f32 %v1250, 1.442695
    %v1274 = vpow.pop %v1273
    %v1275 = vmul.f32 %v1251, 1.442695
    %v1276 = vpow.pop %v1275
    %v1277 = vmul.f32 %v1252, 1.442695
    %v1278 = vpow.pop %v1277
    %v1279 = vmul.f32 %v1253, 1.442695
    %v1280 = vpow.pop %v1279
    %v1281 = vmul.f32 %v1254, 1.442695
    %v1282 = vpow.pop %v1281
    %v1283 = vmul.f32 %v1255, 1.442695
    %v1284 = vpow.pop %v1283
    %v1285 = vmul.f32 %v1256, 1.442695
    %v1286 = vpow.pop %v1285
    %v1287 = vmul.f32 %v1257, 1.442695
    %v1288 = vpow.pop %v1287
    %v1289 = vmul.f32 %v1258, 1.442695
    %v1290 = vpow.pop %v1289
    %v1291 = vsel %vm1194, %v1260, 0.0
    %1292 = vadd.xlane.f32.xlu0 %v1291
    %v1293 = vpop.xlane.xlu0 %1292
    %v1294 = vsel %vm1194, %v1262, 0.0
    %1295 = vadd.xlane.f32.xlu0 %v1294
    %v1296 = vpop.xlane.xlu0 %1295
    %v1297 = vsel %vm1194, %v1264, 0.0
    %1298 = vadd.xlane.f32.xlu0 %v1297
    %v1299 = vpop.xlane.xlu0 %1298
    %v1300 = vsel %vm1194, %v1266, 0.0
    %1301 = vadd.xlane.f32.xlu0 %v1300
    %v1302 = vpop.xlane.xlu0 %1301
    %v1303 = vsel %vm1194, %v1268, 0.0
    %1304 = vadd.xlane.f32.xlu0 %v1303
    %v1305 = vpop.xlane.xlu0 %1304
    %v1306 = vsel %vm1194, %v1270, 0.0
    %1307 = vadd.xlane.f32.xlu0 %v1306
    %v1308 = vpop.xlane.xlu0 %1307
    %v1309 = vsel %vm1194, %v1272, 0.0
    %1310 = vadd.xlane.f32.xlu0 %v1309
    %v1311 = vpop.xlane.xlu0 %1310
    %v1312 = vsel %vm1194, %v1274, 0.0
    %1313 = vadd.xlane.f32.xlu0 %v1312
    %v1314 = vpop.xlane.xlu0 %1313
    %v1315 = vsel %vm1194, %v1276, 0.0
    %1316 = vadd.xlane.f32.xlu0 %v1315
    %v1317 = vpop.xlane.xlu0 %1316
    %v1318 = vsel %vm1194, %v1278, 0.0
    %1319 = vadd.xlane.f32.xlu0 %v1318
    %v1320 = vpop.xlane.xlu0 %1319
    %v1321 = vsel %vm1194, %v1280, 0.0
    %1322 = vadd.xlane.f32.xlu0 %v1321
    %v1323 = vpop.xlane.xlu0 %1322
    %v1324 = vsel %vm1194, %v1282, 0.0
    %1325 = vadd.xlane.f32.xlu0 %v1324
    %v1326 = vpop.xlane.xlu0 %1325
    %v1327 = vsel %vm1194, %v1284, 0.0
    %1328 = vadd.xlane.f32.xlu0 %v1327
    %v1329 = vpop.xlane.xlu0 %1328
    %v1330 = vsel %vm1194, %v1286, 0.0
    %1331 = vadd.xlane.f32.xlu0 %v1330
    %v1332 = vpop.xlane.xlu0 %1331
    %v1333 = vsel %vm1194, %v1288, 0.0
    %1334 = vadd.xlane.f32.xlu0 %v1333
    %v1335 = vpop.xlane.xlu0 %1334
    %v1336 = vsel %vm1194, %v1290, 0.0
    %1337 = vadd.xlane.f32.xlu0 %v1336
    %v1338 = vpop.xlane.xlu0 %1337
    %v1339 = vrcp.pop %v1293
    %v1340 = vmul.f32 %v1260, %v1339
    %v1341 = vrcp.pop %v1296
    %v1342 = vmul.f32 %v1262, %v1341
    %v1343 = vrcp.pop %v1299
    %v1344 = vmul.f32 %v1264, %v1343
    %v1345 = vrcp.pop %v1302
    %v1346 = vmul.f32 %v1266, %v1345
    %v1347 = vrcp.pop %v1305
    %v1348 = vmul.f32 %v1268, %v1347
    %v1349 = vrcp.pop %v1308
    %v1350 = vmul.f32 %v1270, %v1349
    %v1351 = vrcp.pop %v1311
    %v1352 = vmul.f32 %v1272, %v1351
    %v1353 = vrcp.pop %v1314
    %v1354 = vmul.f32 %v1274, %v1353
    %v1355 = vrcp.pop %v1317
    %v1356 = vmul.f32 %v1276, %v1355
    %v1357 = vrcp.pop %v1320
    %v1358 = vmul.f32 %v1278, %v1357
    %v1359 = vrcp.pop %v1323
    %v1360 = vmul.f32 %v1280, %v1359
    %v1361 = vrcp.pop %v1326
    %v1362 = vmul.f32 %v1282, %v1361
    %v1363 = vrcp.pop %v1329
    %v1364 = vmul.f32 %v1284, %v1363
    %v1365 = vrcp.pop %v1332
    %v1366 = vmul.f32 %v1286, %v1365
    %v1367 = vrcp.pop %v1335
    %v1368 = vmul.f32 %v1288, %v1367
    %v1369 = vrcp.pop %v1338
    %v1370 = vmul.f32 %v1290, %v1369
    %v1371 = vpack.c.bf16 %v1342, %v1340
    %v1372 = vpack.c.bf16 %v1346, %v1344
    %v1373 = vpack.c.bf16 %v1350, %v1348
    %v1374 = vpack.c.bf16 %v1354, %v1352
    %v1375 = vpack.c.bf16 %v1358, %v1356
    %v1376 = vpack.c.bf16 %v1362, %v1360
    %v1377 = vpack.c.bf16 %v1366, %v1364
    %v1378 = vpack.c.bf16 %v1370, %v1368
    %v1379 = vld [vmem:[%s8] sm:$0xff]
    %v1380 = vld [vmem:[%s8 + $0x8] sm:$0xff]
    %v1381 = vld [vmem:[%s8 + $0x10] sm:$0xff]
    %v1382 = vld [vmem:[%s8 + $0x18] sm:$0xff]
    %v1387 = vunpack.c.l.b16 %v1379
    %v1388 = vunpack.c.h.b16 %v1379
    %v1389 = vunpack.c.l.b16 %v1380
    %v1390 = vunpack.c.h.b16 %v1380
    %v1391 = vunpack.c.l.b16 %v1381
    %v1392 = vunpack.c.h.b16 %v1381
    %v1393 = vunpack.c.l.b16 %v1382
    %v1394 = vunpack.c.h.b16 %v1382
    %v1395 = vpack.c.b16 %v1389, %v1387
    %v1396 = vpack.c.b16 %v1390, %v1388
    %v1397 = vpack.c.b16 %v1393, %v1391
    %v1398 = vpack.c.b16 %v1394, %v1392
    %v1404 = vsel %vm1194, %v1371, 0
    %v1407 = vsel %vm1194, %v1372, 0
    %v1410 = vsel %vm1194, %v1373, 0
    %v1413 = vsel %vm1194, %v1374, 0
    %v1416 = vsel %vm1194, %v1375, 0
    %v1419 = vsel %vm1194, %v1376, 0
    %v1422 = vsel %vm1194, %v1377, 0
    %v1425 = vsel %vm1194, %v1378, 0
    %1427 = vmatprep.subr.bf16.mxu0 %v1396
    %1428 = vmatpush1.bf16.msra.mxu0 %v1395
    %1429 = vmatprep.subr.bf16.mxu0 %v1398
    %1430 = vmatpush1.bf16.msra.mxu0 %v1397
    %1431 = vmatprep.subr.bf16.mxu0 0
    %1432 = vmatpush1.bf16.msra.mxu0 0
    %1433 = vmatprep.subr.bf16.mxu0 0
    %1434 = vmatpush1.bf16.msra.mxu0 0
    %1435 = vmatprep.subr.bf16.mxu0 0
    %1436 = vmatpush1.bf16.msra.mxu0 0
    %1437 = vmatprep.subr.bf16.mxu0 0
    %1438 = vmatpush1.bf16.msra.mxu0 0
    %1439 = vmatprep.subr.bf16.mxu0 0
    %1440 = vmatpush1.bf16.msra.mxu0 0
    %1441 = vmatprep.subr.bf16.mxu0 0
    %1442 = vmatpush1.bf16.msra.mxu0 0
    %1443 = vmatprep.subr.bf16.mxu0 0
    %1444 = vmatpush1.bf16.msra.mxu0 0
    %1445 = vmatprep.subr.bf16.mxu0 0
    %1446 = vmatpush1.bf16.msra.mxu0 0
    %1447 = vmatprep.subr.bf16.mxu0 0
    %1448 = vmatpush1.bf16.msra.mxu0 0
    %1449 = vmatprep.subr.bf16.mxu0 0
    %1450 = vmatpush1.bf16.msra.mxu0 0
    %1451 = vmatprep.subr.bf16.mxu0 0
    %1452 = vmatpush1.bf16.msra.mxu0 0
    %1453 = vmatprep.subr.bf16.mxu0 0
    %1454 = vmatpush1.bf16.msra.mxu0 0
    %1455 = vmatprep.subr.bf16.mxu0 0
    %1456 = vmatpush1.bf16.msra.mxu0 0
    %1457 = vmatprep.subr.bf16.mxu0 0
    %1458 = vmatpush1.bf16.msra.mxu0 0
    %1459 = vmatprep.mubr.bf16.mxu0 0
    %1460 = vmatmul.mubr.bf16.gmra.mrb[0].mxu0 %v1404
    %v1461 = vpop.f32.mrb[0].mxu0
    %v1462 = vadd.f32 0.0, %v1461
    %v1463 = vpop.f32.mrb[0].mxu0
    %v1464 = vadd.f32 0.0, %v1463
    %v1465 = vpop.f32.mrb[0].mxu0
    %v1466 = vadd.f32 0.0, %v1465
    %v1467 = vpop.f32.mrb[0].mxu0
    %v1468 = vadd.f32 0.0, %v1467
    %1469 = vmatprep.mubr.bf16.mxu0 0
    %1470 = vmatmul.mubr.bf16.gmra.mrb[0].mxu0 %v1407
    %v1471 = vpop.f32.mrb[0].mxu0
    %v1472 = vadd.f32 0.0, %v1471
    %v1473 = vpop.f32.mrb[0].mxu0
    %v1474 = vadd.f32 0.0, %v1473
    %v1475 = vpop.f32.mrb[0].mxu0
    %v1476 = vadd.f32 0.0, %v1475
    %v1477 = vpop.f32.mrb[0].mxu0
    %v1478 = vadd.f32 0.0, %v1477
    %1479 = vmatprep.mubr.bf16.mxu0 0
    %1480 = vmatmul.mubr.bf16.gmra.mrb[0].mxu0 %v1410
    %v1481 = vpop.f32.mrb[0].mxu0
    %v1482 = vadd.f32 0.0, %v1481
    %v1483 = vpop.f32.mrb[0].mxu0
    %v1484 = vadd.f32 0.0, %v1483
    %v1485 = vpop.f32.mrb[0].mxu0
    %v1486 = vadd.f32 0.0, %v1485
    %v1487 = vpop.f32.mrb[0].mxu0
    %v1488 = vadd.f32 0.0, %v1487
    %1489 = vmatprep.mubr.bf16.mxu0 0
    %1490 = vmatmul.mubr.bf16.gmra.mrb[0].mxu0 %v1413
    %v1491 = vpop.f32.mrb[0].mxu0
    %v1492 = vadd.f32 0.0, %v1491
    %v1493 = vpop.f32.mrb[0].mxu0
    %v1494 = vadd.f32 0.0, %v1493
    %v1495 = vpop.f32.mrb[0].mxu0
    %v1496 = vadd.f32 0.0, %v1495
    %v1497 = vpop.f32.mrb[0].mxu0
    %v1498 = vadd.f32 0.0, %v1497
    %1499 = vmatprep.mubr.bf16.mxu0 0
    %1500 = vmatmul.mubr.bf16.gmra.mrb[0].mxu0 %v1416
    %v1501 = vpop.f32.mrb[0].mxu0
    %v1502 = vadd.f32 0.0, %v1501
    %v1503 = vpop.f32.mrb[0].mxu0
    %v1504 = vadd.f32 0.0, %v1503
    %v1505 = vpop.f32.mrb[0].mxu0
    %v1506 = vadd.f32 0.0, %v1505
    %v1507 = vpop.f32.mrb[0].mxu0
    %v1508 = vadd.f32 0.0, %v1507
    %1509 = vmatprep.mubr.bf16.mxu0 0
    %1510 = vmatmul.mubr.bf16.gmra.mrb[0].mxu0 %v1419
    %v1511 = vpop.f32.mrb[0].mxu0
    %v1512 = vadd.f32 0.0, %v1511
    %v1513 = vpop.f32.mrb[0].mxu0
    %v1514 = vadd.f32 0.0, %v1513
    %v1515 = vpop.f32.mrb[0].mxu0
    %v1516 = vadd.f32 0.0, %v1515
    %v1517 = vpop.f32.mrb[0].mxu0
    %v1518 = vadd.f32 0.0, %v1517
    %1519 = vmatprep.mubr.bf16.mxu0 0
    %1520 = vmatmul.mubr.bf16.gmra.mrb[0].mxu0 %v1422
    %v1521 = vpop.f32.mrb[0].mxu0
    %v1522 = vadd.f32 0.0, %v1521
    %v1523 = vpop.f32.mrb[0].mxu0
    %v1524 = vadd.f32 0.0, %v1523
    %v1525 = vpop.f32.mrb[0].mxu0
    %v1526 = vadd.f32 0.0, %v1525
    %v1527 = vpop.f32.mrb[0].mxu0
    %v1528 = vadd.f32 0.0, %v1527
    %1529 = vmatprep.mubr.bf16.mxu0 0
    %1530 = vmatmul.mubr.bf16.gmra.mrb[0].mxu0 %v1425
    %v1531 = vpop.f32.mrb[0].mxu0
    %v1532 = vadd.f32 0.0, %v1531
    %v1533 = vpop.f32.mrb[0].mxu0
    %v1534 = vadd.f32 0.0, %v1533
    %v1535 = vpop.f32.mrb[0].mxu0
    %v1536 = vadd.f32 0.0, %v1535
    %v1537 = vpop.f32.mrb[0].mxu0
    %v1538 = vadd.f32 0.0, %v1537
    %1539 = vdwg.mxu0
    %v1540 = vadd.f32 %v1462, %v1466
    %v1541 = vadd.f32 %v1540, %v1472
    %v1542 = vadd.f32 %v1541, %v1476
    %v1543 = vadd.f32 %v1542, %v1482
    %v1544 = vadd.f32 %v1543, %v1486
    %v1545 = vadd.f32 %v1544, %v1492
    %v1546 = vadd.f32 %v1545, %v1496
    %v1547 = vadd.f32 %v1546, %v1502
    %v1548 = vadd.f32 %v1547, %v1506
    %v1549 = vadd.f32 %v1548, %v1512
    %v1550 = vadd.f32 %v1549, %v1516
    %v1551 = vadd.f32 %v1550, %v1522
    %v1552 = vadd.f32 %v1551, %v1526
    %v1553 = vadd.f32 %v1552, %v1532
    %v1554 = vadd.f32 %v1553, %v1536
    %v1555 = vrot.slane %v1554, 4
    %v1556 = vadd.f32 %v1554, %v1555
    %v1557 = vrot.slane %v1556, 2
    %v1558 = vadd.f32 %v1556, %v1557
    %v1559 = vrot.slane %v1558, 1
    %v1560 = vadd.f32 %v1558, %v1559
    %v1561 = vadd.f32 %v1464, %v1468
    %v1562 = vadd.f32 %v1561, %v1474
    %v1563 = vadd.f32 %v1562, %v1478
    %v1564 = vadd.f32 %v1563, %v1484
    %v1565 = vadd.f32 %v1564, %v1488
    %v1566 = vadd.f32 %v1565, %v1494
    %v1567 = vadd.f32 %v1566, %v1498
    %v1568 = vadd.f32 %v1567, %v1504
    %v1569 = vadd.f32 %v1568, %v1508
    %v1570 = vadd.f32 %v1569, %v1514
    %v1571 = vadd.f32 %v1570, %v1518
    %v1572 = vadd.f32 %v1571, %v1524
    %v1573 = vadd.f32 %v1572, %v1528
    %v1574 = vadd.f32 %v1573, %v1534
    %v1575 = vadd.f32 %v1574, %v1538
    %v1576 = vrot.slane %v1575, 4
    %v1577 = vadd.f32 %v1575, %v1576
    %v1578 = vrot.slane %v1577, 2
    %v1579 = vadd.f32 %v1577, %v1578
    %v1580 = vrot.slane %v1579, 1
    %v1581 = vadd.f32 %v1579, %v1580
    %v1582 = vmul.f32 %v1560, 0.0078125
    %v1583 = vmul.f32 %v1581, 0.0078125
    %v1584 = vmul.f32 %v1462, %v1462
    %v1585 = vmul.f32 %v1464, %v1464
    %v1586 = vmul.f32 %v1466, %v1466
    %v1587 = vmul.f32 %v1468, %v1468
    %v1588 = vmul.f32 %v1472, %v1472
    %v1589 = vmul.f32 %v1474, %v1474
    %v1590 = vmul.f32 %v1476, %v1476
    %v1591 = vmul.f32 %v1478, %v1478
    %v1592 = vmul.f32 %v1482, %v1482
    %v1593 = vmul.f32 %v1484, %v1484
    %v1594 = vmul.f32 %v1486, %v1486
    %v1595 = vmul.f32 %v1488, %v1488
    %v1596 = vmul.f32 %v1492, %v1492
    %v1597 = vmul.f32 %v1494, %v1494
    %v1598 = vmul.f32 %v1496, %v1496
    %v1599 = vmul.f32 %v1498, %v1498
    %v1600 = vmul.f32 %v1502, %v1502
    %v1601 = vmul.f32 %v1504, %v1504
    %v1602 = vmul.f32 %v1506, %v1506
    %v1603 = vmul.f32 %v1508, %v1508
    %v1604 = vmul.f32 %v1512, %v1512
    %v1605 = vmul.f32 %v1514, %v1514
    %v1606 = vmul.f32 %v1516, %v1516
    %v1607 = vmul.f32 %v1518, %v1518
    %v1608 = vmul.f32 %v1522, %v1522
    %v1609 = vmul.f32 %v1524, %v1524
    %v1610 = vmul.f32 %v1526, %v1526
    %v1611 = vmul.f32 %v1528, %v1528
    %v1612 = vmul.f32 %v1532, %v1532
    %v1613 = vmul.f32 %v1534, %v1534
    %v1614 = vmul.f32 %v1536, %v1536
    %v1615 = vmul.f32 %v1538, %v1538
    %v1616 = vadd.f32 %v1584, %v1586
    %v1617 = vadd.f32 %v1616, %v1588
    %v1618 = vadd.f32 %v1617, %v1590
    %v1619 = vadd.f32 %v1618, %v1592
    %v1620 = vadd.f32 %v1619, %v1594
    %v1621 = vadd.f32 %v1620, %v1596
    %v1622 = vadd.f32 %v1621, %v1598
    %v1623 = vadd.f32 %v1622, %v1600
    %v1624 = vadd.f32 %v1623, %v1602
    %v1625 = vadd.f32 %v1624, %v1604
    %v1626 = vadd.f32 %v1625, %v1606
    %v1627 = vadd.f32 %v1626, %v1608
    %v1628 = vadd.f32 %v1627, %v1610
    %v1629 = vadd.f32 %v1628, %v1612
    %v1630 = vadd.f32 %v1629, %v1614
    %v1631 = vrot.slane %v1630, 4
    %v1632 = vadd.f32 %v1630, %v1631
    %v1633 = vrot.slane %v1632, 2
    %v1634 = vadd.f32 %v1632, %v1633
    %v1635 = vrot.slane %v1634, 1
    %v1636 = vadd.f32 %v1634, %v1635
    %v1637 = vadd.f32 %v1585, %v1587
    %v1638 = vadd.f32 %v1637, %v1589
    %v1639 = vadd.f32 %v1638, %v1591
    %v1640 = vadd.f32 %v1639, %v1593
    %v1641 = vadd.f32 %v1640, %v1595
    %v1642 = vadd.f32 %v1641, %v1597
    %v1643 = vadd.f32 %v1642, %v1599
    %v1644 = vadd.f32 %v1643, %v1601
    %v1645 = vadd.f32 %v1644, %v1603
    %v1646 = vadd.f32 %v1645, %v1605
    %v1647 = vadd.f32 %v1646, %v1607
    %v1648 = vadd.f32 %v1647, %v1609
    %v1649 = vadd.f32 %v1648, %v1611
    %v1650 = vadd.f32 %v1649, %v1613
    %v1651 = vadd.f32 %v1650, %v1615
    %v1652 = vrot.slane %v1651, 4
    %v1653 = vadd.f32 %v1651, %v1652
    %v1654 = vrot.slane %v1653, 2
    %v1655 = vadd.f32 %v1653, %v1654
    %v1656 = vrot.slane %v1655, 1
    %v1657 = vadd.f32 %v1655, %v1656
    %v1658 = vmul.f32 %v1636, 0.0078125
    %v1659 = vmul.f32 %v1657, 0.0078125
    %v1660 = vmul.f32 %v1582, %v1582
    %v1661 = vmul.f32 %v1583, %v1583
    %v1662 = vsub.f32 %v1658, %v1660
    %v1663 = vsub.f32 %v1659, %v1661
    %v1664 = vmax.f32 %v1662, 0.0
    %v1665 = vmax.f32 %v1663, 0.0
    %v1666 = vsub.f32 %v1462, %v1582
    %v1667 = vsub.f32 %v1464, %v1583
    %v1668 = vsub.f32 %v1466, %v1582
    %v1669 = vsub.f32 %v1468, %v1583
    %v1670 = vsub.f32 %v1472, %v1582
    %v1671 = vsub.f32 %v1474, %v1583
    %v1672 = vsub.f32 %v1476, %v1582
    %v1673 = vsub.f32 %v1478, %v1583
    %v1674 = vsub.f32 %v1482, %v1582
    %v1675 = vsub.f32 %v1484, %v1583
    %v1676 = vsub.f32 %v1486, %v1582
    %v1677 = vsub.f32 %v1488, %v1583
    %v1678 = vsub.f32 %v1492, %v1582
    %v1679 = vsub.f32 %v1494, %v1583
    %v1680 = vsub.f32 %v1496, %v1582
    %v1681 = vsub.f32 %v1498, %v1583
    %v1682 = vsub.f32 %v1502, %v1582
    %v1683 = vsub.f32 %v1504, %v1583
    %v1684 = vsub.f32 %v1506, %v1582
    %v1685 = vsub.f32 %v1508, %v1583
    %v1686 = vsub.f32 %v1512, %v1582
    %v1687 = vsub.f32 %v1514, %v1583
    %v1688 = vsub.f32 %v1516, %v1582
    %v1689 = vsub.f32 %v1518, %v1583
    %v1690 = vsub.f32 %v1522, %v1582
    %v1691 = vsub.f32 %v1524, %v1583
    %v1692 = vsub.f32 %v1526, %v1582
    %v1693 = vsub.f32 %v1528, %v1583
    %v1694 = vsub.f32 %v1532, %v1582
    %v1695 = vsub.f32 %v1534, %v1583
    %v1696 = vsub.f32 %v1536, %v1582
    %v1697 = vsub.f32 %v1538, %v1583
    %v1698 = vadd.f32 %v1664, 1e-05
    %v1699 = vadd.f32 %v1665, 1e-05
    %v1700 = vrsqrt.pop %v1698
    %v1701 = vrsqrt.pop %v1699
    %v1702 = vmul.f32 %v1666, %v1700
    %v1703 = vmul.f32 %v1667, %v1701
    %v1704 = vmul.f32 %v1668, %v1700
    %v1705 = vmul.f32 %v1669, %v1701
    %v1706 = vmul.f32 %v1670, %v1700
    %v1707 = vmul.f32 %v1671, %v1701
    %v1708 = vmul.f32 %v1672, %v1700
    %v1709 = vmul.f32 %v1673, %v1701
    %v1710 = vmul.f32 %v1674, %v1700
    %v1711 = vmul.f32 %v1675, %v1701
    %v1712 = vmul.f32 %v1676, %v1700
    %v1713 = vmul.f32 %v1677, %v1701
    %v1714 = vmul.f32 %v1678, %v1700
    %v1715 = vmul.f32 %v1679, %v1701
    %v1716 = vmul.f32 %v1680, %v1700
    %v1717 = vmul.f32 %v1681, %v1701
    %v1718 = vmul.f32 %v1682, %v1700
    %v1719 = vmul.f32 %v1683, %v1701
    %v1720 = vmul.f32 %v1684, %v1700
    %v1721 = vmul.f32 %v1685, %v1701
    %v1722 = vmul.f32 %v1686, %v1700
    %v1723 = vmul.f32 %v1687, %v1701
    %v1724 = vmul.f32 %v1688, %v1700
    %v1725 = vmul.f32 %v1689, %v1701
    %v1726 = vmul.f32 %v1690, %v1700
    %v1727 = vmul.f32 %v1691, %v1701
    %v1728 = vmul.f32 %v1692, %v1700
    %v1729 = vmul.f32 %v1693, %v1701
    %v1730 = vmul.f32 %v1694, %v1700
    %v1731 = vmul.f32 %v1695, %v1701
    %v1732 = vmul.f32 %v1696, %v1700
    %v1733 = vmul.f32 %v1697, %v1701
    %v1734 = vmax.f32 %v1702, %v1703
    %1735 = vmax.xlane.f32.xlu0 %v1734
    %v1736 = vpop.xlane.xlu0 %1735
    %v1737 = vmax.f32 %v1704, %v1705
    %1738 = vmax.xlane.f32.xlu0 %v1737
    %v1739 = vpop.xlane.xlu0 %1738
    %v1740 = vmax.f32 %v1706, %v1707
    %1741 = vmax.xlane.f32.xlu0 %v1740
    %v1742 = vpop.xlane.xlu0 %1741
    %v1743 = vmax.f32 %v1708, %v1709
    %1744 = vmax.xlane.f32.xlu0 %v1743
    %v1745 = vpop.xlane.xlu0 %1744
    %v1746 = vmax.f32 %v1710, %v1711
    %1747 = vmax.xlane.f32.xlu0 %v1746
    %v1748 = vpop.xlane.xlu0 %1747
    %v1749 = vmax.f32 %v1712, %v1713
    %1750 = vmax.xlane.f32.xlu0 %v1749
    %v1751 = vpop.xlane.xlu0 %1750
    %v1752 = vmax.f32 %v1714, %v1715
    %1753 = vmax.xlane.f32.xlu0 %v1752
    %v1754 = vpop.xlane.xlu0 %1753
    %v1755 = vmax.f32 %v1716, %v1717
    %1756 = vmax.xlane.f32.xlu0 %v1755
    %v1757 = vpop.xlane.xlu0 %1756
    %v1758 = vmax.f32 %v1718, %v1719
    %1759 = vmax.xlane.f32.xlu0 %v1758
    %v1760 = vpop.xlane.xlu0 %1759
    %v1761 = vmax.f32 %v1720, %v1721
    %1762 = vmax.xlane.f32.xlu0 %v1761
    %v1763 = vpop.xlane.xlu0 %1762
    %v1764 = vmax.f32 %v1722, %v1723
    %1765 = vmax.xlane.f32.xlu0 %v1764
    %v1766 = vpop.xlane.xlu0 %1765
    %v1767 = vmax.f32 %v1724, %v1725
    %1768 = vmax.xlane.f32.xlu0 %v1767
    %v1769 = vpop.xlane.xlu0 %1768
    %v1770 = vmax.f32 %v1726, %v1727
    %1771 = vmax.xlane.f32.xlu0 %v1770
    %v1772 = vpop.xlane.xlu0 %1771
    %v1773 = vmax.f32 %v1728, %v1729
    %1774 = vmax.xlane.f32.xlu0 %v1773
    %v1775 = vpop.xlane.xlu0 %1774
    %v1776 = vmax.f32 %v1730, %v1731
    %1777 = vmax.xlane.f32.xlu0 %v1776
    %v1778 = vpop.xlane.xlu0 %1777
    %v1779 = vmax.f32 %v1732, %v1733
    %1780 = vmax.xlane.f32.xlu0 %v1779
    %v1781 = vpop.xlane.xlu0 %1780
    %v1782 = vsub.f32 %v1702, %v1736
    %v1783 = vsub.f32 %v1703, %v1736
    %v1784 = vsub.f32 %v1704, %v1739
    %v1785 = vsub.f32 %v1705, %v1739
    %v1786 = vsub.f32 %v1706, %v1742
    %v1787 = vsub.f32 %v1707, %v1742
    %v1788 = vsub.f32 %v1708, %v1745
    %v1789 = vsub.f32 %v1709, %v1745
    %v1790 = vsub.f32 %v1710, %v1748
    %v1791 = vsub.f32 %v1711, %v1748
    %v1792 = vsub.f32 %v1712, %v1751
    %v1793 = vsub.f32 %v1713, %v1751
    %v1794 = vsub.f32 %v1714, %v1754
    %v1795 = vsub.f32 %v1715, %v1754
    %v1796 = vsub.f32 %v1716, %v1757
    %v1797 = vsub.f32 %v1717, %v1757
    %v1798 = vsub.f32 %v1718, %v1760
    %v1799 = vsub.f32 %v1719, %v1760
    %v1800 = vsub.f32 %v1720, %v1763
    %v1801 = vsub.f32 %v1721, %v1763
    %v1802 = vsub.f32 %v1722, %v1766
    %v1803 = vsub.f32 %v1723, %v1766
    %v1804 = vsub.f32 %v1724, %v1769
    %v1805 = vsub.f32 %v1725, %v1769
    %v1806 = vsub.f32 %v1726, %v1772
    %v1807 = vsub.f32 %v1727, %v1772
    %v1808 = vsub.f32 %v1728, %v1775
    %v1809 = vsub.f32 %v1729, %v1775
    %v1810 = vsub.f32 %v1730, %v1778
    %v1811 = vsub.f32 %v1731, %v1778
    %v1812 = vsub.f32 %v1732, %v1781
    %v1813 = vsub.f32 %v1733, %v1781
    %v1814 = vmul.f32 %v1782, 1.442695
    %v1815 = vpow.pop %v1814
    %v1816 = vmul.f32 %v1783, 1.442695
    %v1817 = vpow.pop %v1816
    %v1818 = vmul.f32 %v1784, 1.442695
    %v1819 = vpow.pop %v1818
    %v1820 = vmul.f32 %v1785, 1.442695
    %v1821 = vpow.pop %v1820
    %v1822 = vmul.f32 %v1786, 1.442695
    %v1823 = vpow.pop %v1822
    %v1824 = vmul.f32 %v1787, 1.442695
    %v1825 = vpow.pop %v1824
    %v1826 = vmul.f32 %v1788, 1.442695
    %v1827 = vpow.pop %v1826
    %v1828 = vmul.f32 %v1789, 1.442695
    %v1829 = vpow.pop %v1828
    %v1830 = vmul.f32 %v1790, 1.442695
    %v1831 = vpow.pop %v1830
    %v1832 = vmul.f32 %v1791, 1.442695
    %v1833 = vpow.pop %v1832
    %v1834 = vmul.f32 %v1792, 1.442695
    %v1835 = vpow.pop %v1834
    %v1836 = vmul.f32 %v1793, 1.442695
    %v1837 = vpow.pop %v1836
    %v1838 = vmul.f32 %v1794, 1.442695
    %v1839 = vpow.pop %v1838
    %v1840 = vmul.f32 %v1795, 1.442695
    %v1841 = vpow.pop %v1840
    %v1842 = vmul.f32 %v1796, 1.442695
    %v1843 = vpow.pop %v1842
    %v1844 = vmul.f32 %v1797, 1.442695
    %v1845 = vpow.pop %v1844
    %v1846 = vmul.f32 %v1798, 1.442695
    %v1847 = vpow.pop %v1846
    %v1848 = vmul.f32 %v1799, 1.442695
    %v1849 = vpow.pop %v1848
    %v1850 = vmul.f32 %v1800, 1.442695
    %v1851 = vpow.pop %v1850
    %v1852 = vmul.f32 %v1801, 1.442695
    %v1853 = vpow.pop %v1852
    %v1854 = vmul.f32 %v1802, 1.442695
    %v1855 = vpow.pop %v1854
    %v1856 = vmul.f32 %v1803, 1.442695
    %v1857 = vpow.pop %v1856
    %v1858 = vmul.f32 %v1804, 1.442695
    %v1859 = vpow.pop %v1858
    %v1860 = vmul.f32 %v1805, 1.442695
    %v1861 = vpow.pop %v1860
    %v1862 = vmul.f32 %v1806, 1.442695
    %v1863 = vpow.pop %v1862
    %v1864 = vmul.f32 %v1807, 1.442695
    %v1865 = vpow.pop %v1864
    %v1866 = vmul.f32 %v1808, 1.442695
    %v1867 = vpow.pop %v1866
    %v1868 = vmul.f32 %v1809, 1.442695
    %v1869 = vpow.pop %v1868
    %v1870 = vmul.f32 %v1810, 1.442695
    %v1871 = vpow.pop %v1870
    %v1872 = vmul.f32 %v1811, 1.442695
    %v1873 = vpow.pop %v1872
    %v1874 = vmul.f32 %v1812, 1.442695
    %v1875 = vpow.pop %v1874
    %v1876 = vmul.f32 %v1813, 1.442695
    %v1877 = vpow.pop %v1876
    %v1878 = vadd.f32 %v1815, %v1817
    %1879 = vadd.xlane.f32.xlu0 %v1878
    %v1880 = vpop.xlane.xlu0 %1879
    %v1881 = vadd.f32 %v1819, %v1821
    %1882 = vadd.xlane.f32.xlu0 %v1881
    %v1883 = vpop.xlane.xlu0 %1882
    %v1884 = vadd.f32 %v1823, %v1825
    %1885 = vadd.xlane.f32.xlu0 %v1884
    %v1886 = vpop.xlane.xlu0 %1885
    %v1887 = vadd.f32 %v1827, %v1829
    %1888 = vadd.xlane.f32.xlu0 %v1887
    %v1889 = vpop.xlane.xlu0 %1888
    %v1890 = vadd.f32 %v1831, %v1833
    %1891 = vadd.xlane.f32.xlu0 %v1890
    %v1892 = vpop.xlane.xlu0 %1891
    %v1893 = vadd.f32 %v1835, %v1837
    %1894 = vadd.xlane.f32.xlu0 %v1893
    %v1895 = vpop.xlane.xlu0 %1894
    %v1896 = vadd.f32 %v1839, %v1841
    %1897 = vadd.xlane.f32.xlu0 %v1896
    %v1898 = vpop.xlane.xlu0 %1897
    %v1899 = vadd.f32 %v1843, %v1845
    %1900 = vadd.xlane.f32.xlu0 %v1899
    %v1901 = vpop.xlane.xlu0 %1900
    %v1902 = vadd.f32 %v1847, %v1849
    %1903 = vadd.xlane.f32.xlu0 %v1902
    %v1904 = vpop.xlane.xlu0 %1903
    %v1905 = vadd.f32 %v1851, %v1853
    %1906 = vadd.xlane.f32.xlu0 %v1905
    %v1907 = vpop.xlane.xlu0 %1906
    %v1908 = vadd.f32 %v1855, %v1857
    %1909 = vadd.xlane.f32.xlu0 %v1908
    %v1910 = vpop.xlane.xlu0 %1909
    %v1911 = vadd.f32 %v1859, %v1861
    %1912 = vadd.xlane.f32.xlu0 %v1911
    %v1913 = vpop.xlane.xlu0 %1912
    %v1914 = vadd.f32 %v1863, %v1865
    %1915 = vadd.xlane.f32.xlu0 %v1914
    %v1916 = vpop.xlane.xlu0 %1915
    %v1917 = vadd.f32 %v1867, %v1869
    %1918 = vadd.xlane.f32.xlu0 %v1917
    %v1919 = vpop.xlane.xlu0 %1918
    %v1920 = vadd.f32 %v1871, %v1873
    %1921 = vadd.xlane.f32.xlu0 %v1920
    %v1922 = vpop.xlane.xlu0 %1921
    %v1923 = vadd.f32 %v1875, %v1877
    %1924 = vadd.xlane.f32.xlu0 %v1923
    %v1925 = vpop.xlane.xlu0 %1924
    %v1926 = vrcp.pop %v1880
    %v1927 = vmul.f32 %v1815, %v1926
    %v1928 = vmul.f32 %v1817, %v1926
    %v1929 = vrcp.pop %v1883
    %v1930 = vmul.f32 %v1819, %v1929
    %v1931 = vmul.f32 %v1821, %v1929
    %v1932 = vrcp.pop %v1886
    %v1933 = vmul.f32 %v1823, %v1932
    %v1934 = vmul.f32 %v1825, %v1932
    %v1935 = vrcp.pop %v1889
    %v1936 = vmul.f32 %v1827, %v1935
    %v1937 = vmul.f32 %v1829, %v1935
    %v1938 = vrcp.pop %v1892
    %v1939 = vmul.f32 %v1831, %v1938
    %v1940 = vmul.f32 %v1833, %v1938
    %v1941 = vrcp.pop %v1895
    %v1942 = vmul.f32 %v1835, %v1941
    %v1943 = vmul.f32 %v1837, %v1941
    %v1944 = vrcp.pop %v1898
    %v1945 = vmul.f32 %v1839, %v1944
    %v1946 = vmul.f32 %v1841, %v1944
    %v1947 = vrcp.pop %v1901
    %v1948 = vmul.f32 %v1843, %v1947
    %v1949 = vmul.f32 %v1845, %v1947
    %v1950 = vrcp.pop %v1904
    %v1951 = vmul.f32 %v1847, %v1950
    %v1952 = vmul.f32 %v1849, %v1950
    %v1953 = vrcp.pop %v1907
    %v1954 = vmul.f32 %v1851, %v1953
    %v1955 = vmul.f32 %v1853, %v1953
    %v1956 = vrcp.pop %v1910
    %v1957 = vmul.f32 %v1855, %v1956
    %v1958 = vmul.f32 %v1857, %v1956
    %v1959 = vrcp.pop %v1913
    %v1960 = vmul.f32 %v1859, %v1959
    %v1961 = vmul.f32 %v1861, %v1959
    %v1962 = vrcp.pop %v1916
    %v1963 = vmul.f32 %v1863, %v1962
    %v1964 = vmul.f32 %v1865, %v1962
    %v1965 = vrcp.pop %v1919
    %v1966 = vmul.f32 %v1867, %v1965
    %v1967 = vmul.f32 %v1869, %v1965
    %v1968 = vrcp.pop %v1922
    %v1969 = vmul.f32 %v1871, %v1968
    %v1970 = vmul.f32 %v1873, %v1968
    %v1971 = vrcp.pop %v1925
    %v1972 = vmul.f32 %v1875, %v1971
    %v1973 = vmul.f32 %v1877, %v1971
    %1974 = vst [vmem:[#allocation2] sm:$0xff] %v1927
    %1975 = vst [vmem:[#allocation2 + $0x8] sm:$0xff] %v1928
    %1976 = vst [vmem:[#allocation2 + $0x10] sm:$0xff] %v1930
    %1977 = vst [vmem:[#allocation2 + $0x18] sm:$0xff] %v1931
    %1978 = vst [vmem:[#allocation2 + $0x20] sm:$0xff] %v1933
    %1979 = vst [vmem:[#allocation2 + $0x28] sm:$0xff] %v1934
    %1980 = vst [vmem:[#allocation2 + $0x30] sm:$0xff] %v1936
    %1981 = vst [vmem:[#allocation2 + $0x38] sm:$0xff] %v1937
    %1982 = vst [vmem:[#allocation2 + $0x40] sm:$0xff] %v1939
    %1983 = vst [vmem:[#allocation2 + $0x48] sm:$0xff] %v1940
    %1984 = vst [vmem:[#allocation2 + $0x50] sm:$0xff] %v1942
    %1985 = vst [vmem:[#allocation2 + $0x58] sm:$0xff] %v1943
    %1986 = vst [vmem:[#allocation2 + $0x60] sm:$0xff] %v1945
    %1987 = vst [vmem:[#allocation2 + $0x68] sm:$0xff] %v1946
    %1988 = vst [vmem:[#allocation2 + $0x70] sm:$0xff] %v1948
    %1989 = vst [vmem:[#allocation2 + $0x78] sm:$0xff] %v1949
    %1990 = vst [vmem:[#allocation2 + $0x80] sm:$0xff] %v1951
    %1991 = vst [vmem:[#allocation2 + $0x88] sm:$0xff] %v1952
    %1992 = vst [vmem:[#allocation2 + $0x90] sm:$0xff] %v1954
    %1993 = vst [vmem:[#allocation2 + $0x98] sm:$0xff] %v1955
    %1994 = vst [vmem:[#allocation2 + $0xa0] sm:$0xff] %v1957
    %1995 = vst [vmem:[#allocation2 + $0xa8] sm:$0xff] %v1958
    %1996 = vst [vmem:[#allocation2 + $0xb0] sm:$0xff] %v1960
    %1997 = vst [vmem:[#allocation2 + $0xb8] sm:$0xff] %v1961
    %1998 = vst [vmem:[#allocation2 + $0xc0] sm:$0xff] %v1963
    %1999 = vst [vmem:[#allocation2 + $0xc8] sm:$0xff] %v1964
    %2000 = vst [vmem:[#allocation2 + $0xd0] sm:$0xff] %v1966
    %2001 = vst [vmem:[#allocation2 + $0xd8] sm:$0xff] %v1967
    %2002 = vst [vmem:[#allocation2 + $0xe0] sm:$0xff] %v1969
    %2003 = vst [vmem:[#allocation2 + $0xe8] sm:$0xff] %v1970
    %2004 = vst [vmem:[#allocation2 + $0xf0] sm:$0xff] %v1972
    %2005 = vst [vmem:[#allocation2 + $0xf8] sm:$0xff] %v1973
    %2022 = vrot.lane.b32.xlu0 %v1066, 32
    %v2023 = vpop.permute.xlu0 %2022
    %2024 = vrot.lane.b32.xlu0 %v1067, 32
    %v2025 = vpop.permute.xlu0 %2024
    %2026 = vrot.lane.b32.xlu0 %v1068, 32
    %v2027 = vpop.permute.xlu0 %2026
    %2028 = vrot.lane.b32.xlu0 %v1069, 32
    %v2029 = vpop.permute.xlu0 %2028
    %2030 = vrot.lane.b32.xlu0 %v1070, 32
    %v2031 = vpop.permute.xlu0 %2030
    %2032 = vrot.lane.b32.xlu0 %v1071, 32
    %v2033 = vpop.permute.xlu0 %2032
    %2034 = vrot.lane.b32.xlu0 %v1072, 32
    %v2035 = vpop.permute.xlu0 %2034
    %2036 = vrot.lane.b32.xlu0 %v1073, 32
    %v2037 = vpop.permute.xlu0 %2036
    %2038 = vrot.lane.b32.xlu0 %v1074, 32
    %v2039 = vpop.permute.xlu0 %2038
    %2040 = vrot.lane.b32.xlu0 %v1075, 32
    %v2041 = vpop.permute.xlu0 %2040
    %2042 = vrot.lane.b32.xlu0 %v1076, 32
    %v2043 = vpop.permute.xlu0 %2042
    %2044 = vrot.lane.b32.xlu0 %v1077, 32
    %v2045 = vpop.permute.xlu0 %2044
    %2046 = vrot.lane.b32.xlu0 %v1078, 32
    %v2047 = vpop.permute.xlu0 %2046
    %2048 = vrot.lane.b32.xlu0 %v1079, 32
    %v2049 = vpop.permute.xlu0 %2048
    %2050 = vrot.lane.b32.xlu0 %v1080, 32
    %v2051 = vpop.permute.xlu0 %2050
    %2052 = vrot.lane.b32.xlu0 %v1081, 32
    %v2053 = vpop.permute.xlu0 %2052
    %2086 = vrot.lane.b32.xlu0 %v1340, 96
    %v2087 = vpop.permute.xlu0 %2086
    %2088 = vrot.lane.b32.xlu0 %v1342, 96
    %v2089 = vpop.permute.xlu0 %2088
    %2090 = vrot.lane.b32.xlu0 %v1344, 96
    %v2091 = vpop.permute.xlu0 %2090
    %2092 = vrot.lane.b32.xlu0 %v1346, 96
    %v2093 = vpop.permute.xlu0 %2092
    %2094 = vrot.lane.b32.xlu0 %v1348, 96
    %v2095 = vpop.permute.xlu0 %2094
    %2096 = vrot.lane.b32.xlu0 %v1350, 96
    %v2097 = vpop.permute.xlu0 %2096
    %2098 = vrot.lane.b32.xlu0 %v1352, 96
    %v2099 = vpop.permute.xlu0 %2098
    %2100 = vrot.lane.b32.xlu0 %v1354, 96
    %v2101 = vpop.permute.xlu0 %2100
    %2102 = vrot.lane.b32.xlu0 %v1356, 96
    %v2103 = vpop.permute.xlu0 %2102
    %2104 = vrot.lane.b32.xlu0 %v1358, 96
    %v2105 = vpop.permute.xlu0 %2104
    %2106 = vrot.lane.b32.xlu0 %v1360, 96
    %v2107 = vpop.permute.xlu0 %2106
    %2108 = vrot.lane.b32.xlu0 %v1362, 96
    %v2109 = vpop.permute.xlu0 %2108
    %2110 = vrot.lane.b32.xlu0 %v1364, 96
    %v2111 = vpop.permute.xlu0 %2110
    %2112 = vrot.lane.b32.xlu0 %v1366, 96
    %v2113 = vpop.permute.xlu0 %2112
    %2114 = vrot.lane.b32.xlu0 %v1368, 96
    %v2115 = vpop.permute.xlu0 %2114
    %2116 = vrot.lane.b32.xlu0 %v1370, 96
    %v2117 = vpop.permute.xlu0 %2116
    %vm2134 = vcmask 523264
    %v2135 = vsel %vm2134, %v1002, %v2023
    %v2136 = vsel %vm2134, %v1003, %v2025
    %v2137 = vsel %vm2134, %v1004, %v2027
    %v2138 = vsel %vm2134, %v1005, %v2029
    %v2139 = vsel %vm2134, %v1006, %v2031
    %v2140 = vsel %vm2134, %v1007, %v2033
    %v2141 = vsel %vm2134, %v1008, %v2035
    %v2142 = vsel %vm2134, %v1009, %v2037
    %v2143 = vsel %vm2134, %v1010, %v2039
    %v2144 = vsel %vm2134, %v1011, %v2041
    %v2145 = vsel %vm2134, %v1012, %v2043
    %v2146 = vsel %vm2134, %v1013, %v2045
    %v2147 = vsel %vm2134, %v1014, %v2047
    %v2148 = vsel %vm2134, %v1015, %v2049
    %v2149 = vsel %vm2134, %v1016, %v2051
    %v2150 = vsel %vm2134, %v1017, %v2053
    %vm2151 = vcmask 785408
    %v2152 = vsel %vm2151, %v2135, %v2087
    %v2153 = vsel %vm2151, %v2136, %v2089
    %v2154 = vsel %vm2151, %v2137, %v2091
    %v2155 = vsel %vm2151, %v2138, %v2093
    %v2156 = vsel %vm2151, %v2139, %v2095
    %v2157 = vsel %vm2151, %v2140, %v2097
    %v2158 = vsel %vm2151, %v2141, %v2099
    %v2159 = vsel %vm2151, %v2142, %v2101
    %v2160 = vsel %vm2151, %v2143, %v2103
    %v2161 = vsel %vm2151, %v2144, %v2105
    %v2162 = vsel %vm2151, %v2145, %v2107
    %v2163 = vsel %vm2151, %v2146, %v2109
    %v2164 = vsel %vm2151, %v2147, %v2111
    %v2165 = vsel %vm2151, %v2148, %v2113
    %v2166 = vsel %vm2151, %v2149, %v2115
    %v2167 = vsel %vm2151, %v2150, %v2117
    %2168 = vst [vmem:[%s9] sm:$0xff] %v2152
    %2169 = vst [vmem:[%s9 + $0x8] sm:$0xff] %v2153
    %2170 = vst [vmem:[%s9 + $0x10] sm:$0xff] %v2154
    %2171 = vst [vmem:[%s9 + $0x18] sm:$0xff] %v2155
    %2172 = vst [vmem:[%s9 + $0x20] sm:$0xff] %v2156
    %2173 = vst [vmem:[%s9 + $0x28] sm:$0xff] %v2157
    %2174 = vst [vmem:[%s9 + $0x30] sm:$0xff] %v2158
    %2175 = vst [vmem:[%s9 + $0x38] sm:$0xff] %v2159
    %2176 = vst [vmem:[%s9 + $0x40] sm:$0xff] %v2160
    %2177 = vst [vmem:[%s9 + $0x48] sm:$0xff] %v2161
    %2178 = vst [vmem:[%s9 + $0x50] sm:$0xff] %v2162
    %2179 = vst [vmem:[%s9 + $0x58] sm:$0xff] %v2163
    %2180 = vst [vmem:[%s9 + $0x60] sm:$0xff] %v2164
    %2181 = vst [vmem:[%s9 + $0x68] sm:$0xff] %v2165
    %2182 = vst [vmem:[%s9 + $0x70] sm:$0xff] %v2166
    %2183 = vst [vmem:[%s9 + $0x78] sm:$0xff] %v2167
    // Predicated region
    $region38: #{decoder_forward.1} parent=1 // pred_check
      _
    $region39: #{decoder_forward.1} parent=1 // pred_check_branch
      %2185 = sbr.rel (0) target = $region41
    $region40: #{decoder_forward.1} parent=1 // pred_region
      _
    $region41: #{decoder_forward.1} parent=1 // pred_fallthru
      _
    // Predicated region
    $region42: #{decoder_forward.1} parent=1 // pred_check
      _
    $region43: #{decoder_forward.1} parent=1 // pred_check_branch
      %2187 = sbr.rel (0) target = $region45
    $region44: #{decoder_forward.1} parent=1 // pred_region
      %s2189 = ssub.s32 4096, 4096
      %2190 = vsyncadd [#allocation3], %s2189
      %s2191 = sshll.u32 [#allocation2], 4
      %s2192 = int_to_ptr.vmem [resolvable:$true] %s2191
      %2197 = dma.vmem_to_hbm [thread:$0]  %s2192, 4096, %s10, [#allocation3], 256, 256, 16
    $region45: #{decoder_forward.1} parent=1 // pred_fallthru
      _
    // Predicated region
    $region46: #{decoder_forward.1} parent=1 // pred_check
      _
    $region47: #{decoder_forward.1} parent=1 // pred_check_branch
      %2199 = sbr.rel (0) target = $region49
    $region48: #{decoder_forward.1} parent=1 // pred_region
      _
    $region49: #{decoder_forward.1} parent=1 // pred_fallthru
      _
    // Predicated region
    $region50: #{decoder_forward.1} parent=1 // pred_check
      _
    $region51: #{decoder_forward.1} parent=1 // pred_check_branch
      %2201 = sbr.rel (0) target = $region53
    $region52: #{decoder_forward.1} parent=1 // pred_region
      %2202 = dma.done [#allocation3], 4096
    $region53: #{decoder_forward.1} parent=1 // pred_fallthru
      _
    %2203 = vsyncpa [#allocation3], 1

</llo_original>
